<compile_context>
chip_gen: v5e
topology: v5e:2x2
jax: 0.10.0
libtpu: 0.0.40
codegen_flags: <defaults>
</compile_context>

<pallas_src>
import jax
import jax.numpy as jnp
from jax import lax
from jax.experimental import pallas as pl
from jax.experimental.pallas import tpu as pltpu

FEATURE_SIZE = 512
LN_EPS = 1e-5


def _iclassifier_kernel(x_ref, wfe_ref, vecs_ref, wfc_ref, bfc_ref,
                        feats_ref, c_ref):
    # Cast x to bf16 on the VPU (free under DMA) — wrapper ships f32 untouched.
    x = x_ref[...].astype(jnp.bfloat16)                                   # (tn, D_in)

    vecs = vecs_ref[...]                                                  # (3, 512) f32
    b_fe = vecs[0:1, :]
    gamma = vecs[1:2, :]
    beta = vecs[2:3, :]

    # ----- feature extractor (dense projection), bf16 operands, f32 acc -----
    feats = jnp.dot(x, wfe_ref[...],
                    preferred_element_type=jnp.float32) + b_fe            # (tn, 512)

    # ----- LayerNorm over last dim (512): one-pass stats, f32 -----
    inv_d = jnp.float32(1.0 / FEATURE_SIZE)
    mean = jnp.sum(feats, axis=-1, keepdims=True) * inv_d                 # (tn, 1)
    mean_sq = jnp.sum(feats * feats, axis=-1, keepdims=True) * inv_d      # (tn, 1)
    var = mean_sq - mean * mean
    inv = lax.rsqrt(var + LN_EPS)
    feats_n = (feats - mean) * inv * gamma + beta                         # (tn, 512)
    feats_ref[...] = feats_n.astype(feats_ref.dtype)

    # ----- fc : Linear(512, C), bf16 operands, f32 acc -----
    c = jnp.dot(feats_n.astype(jnp.bfloat16), wfc_ref[...],
                preferred_element_type=jnp.float32) + bfc_ref[...]        # (tn, C)
    c_ref[...] = c.astype(c_ref.dtype)


def _round_up(v, m):
    return ((v + m - 1) // m) * m


def _pick_tile_n(n, max_tile):
    """Tile over bag rows: big tiles (mem-bound), but >=2 blocks when possible
    so both TensorCores on v7x get a share of the (only) parallel axis."""
    if n >= 2 * max_tile:
        return max_tile
    half = _round_up(-(-n // 2), 8)          # cdiv(n, 2) rounded to sublane mult
    return max(8, min(max_tile, half))


def iclassifier_forward(x, w_fe, b_fe, ln_gamma, ln_beta, w_fc, b_fc,
                        *, max_tile_n=512, feats_dtype=jnp.float32):
    """x: [N, D_in] float32.  Returns (feats [N, 512], c [N, C])."""
    N, D_in = x.shape
    C = w_fc.shape[1]

    tile_n = _pick_tile_n(N, max_tile_n)
    n_blocks = pl.cdiv(N, tile_n)
    n_pad = n_blocks * tile_n

    # Pad rows only (ragged N); no dtype re-materialization pass over x.
    x_p = x if n_pad == N else jnp.pad(x, ((0, n_pad - N), (0, 0)))

    # Small constants: pre-cast matmul weights to bf16 (one-time, tiny),
    # stack the three (1, 512) vectors into a single operand.
    w_fe_b = w_fe.astype(jnp.bfloat16)                                    # (D_in, 512)
    vecs = jnp.concatenate([b_fe, ln_gamma, ln_beta], axis=0)             # (3, 512)
    vecs = vecs.astype(jnp.float32)
    w_fc_b = w_fc.astype(jnp.bfloat16)                                    # (512, C)
    b_fc_f = b_fc.astype(jnp.float32)                                     # (1, C)

    feats, c = pl.pallas_call(
        _iclassifier_kernel,
        out_shape=(
            jax.ShapeDtypeStruct((n_pad, FEATURE_SIZE), feats_dtype),
            jax.ShapeDtypeStruct((n_pad, C), jnp.float32),
        ),
        grid_spec=pltpu.PrefetchScalarGridSpec(
            num_scalar_prefetch=0,
            grid=(n_blocks,),
            in_specs=[
                pl.BlockSpec((tile_n, D_in), lambda i: (i, 0)),           # x (f32)
                pl.BlockSpec((D_in, FEATURE_SIZE), lambda i: (0, 0)),     # W_fe (bf16)
                pl.BlockSpec((3, FEATURE_SIZE), lambda i: (0, 0)),        # b_fe/gamma/beta
                pl.BlockSpec((FEATURE_SIZE, C), lambda i: (0, 0)),        # W_fc (bf16)
                pl.BlockSpec((1, C), lambda i: (0, 0)),                   # b_fc (f32)
            ],
            out_specs=[
                pl.BlockSpec((tile_n, FEATURE_SIZE), lambda i: (i, 0)),   # feats
                pl.BlockSpec((tile_n, C), lambda i: (i, 0)),              # c (true width)
            ],
        ),
        compiler_params=pltpu.CompilerParams(
            dimension_semantics=("parallel",),       # shards N across v7x's 2 TCs
            vmem_limit_bytes=32 * 1024 * 1024,       # ample on every generation
        ),
    )(x_p, w_fe_b, vecs, w_fc_b, b_fc_f)

    return feats[:N], c[:N]


def _reference(x, w_fe, b_fe, ln_gamma, ln_beta, w_fc, b_fc):
    feats = x @ w_fe + b_fe
    mean = feats.mean(-1, keepdims=True)
    var = ((feats - mean) ** 2).mean(-1, keepdims=True)
    feats = (feats - mean) / jnp.sqrt(var + LN_EPS)
    feats = feats * ln_gamma + ln_beta
    c = feats @ w_fc + b_fc
    return feats, c


if __name__ == "__main__":
    key = jax.random.PRNGKey(0)
    k_x, k_wfe, k_bfe, k_g, k_b, k_wfc, k_bfc = jax.random.split(key, 7)

    N = 100          # instances in the bag (ragged w.r.t. tile multiples)
    D_in = 256       # raw input feature dim
    C = 2            # output_class

    x = jax.random.normal(k_x, (N, D_in), dtype=jnp.float32)

    # feature_extractor weights (Linear D_in -> 512), stored [in, out]
    w_fe = jax.random.normal(k_wfe, (D_in, FEATURE_SIZE), jnp.float32) * 0.02
    b_fe = jax.random.normal(k_bfe, (1, FEATURE_SIZE), jnp.float32) * 0.01

    # LayerNorm(512) affine params (perturbed from PyTorch init for a
    # non-trivial deterministic test)
    ln_gamma = 1.0 + 0.1 * jax.random.normal(k_g, (1, FEATURE_SIZE), jnp.float32)
    ln_beta = 0.1 * jax.random.normal(k_b, (1, FEATURE_SIZE), jnp.float32)

    # fc: Linear(512, C), stored pre-transposed [512, C]
    w_fc = jax.random.normal(k_wfc, (FEATURE_SIZE, C), jnp.float32) * 0.02
    b_fc = jax.random.normal(k_bfc, (1, C), jnp.float32) * 0.01

    feats, c = iclassifier_forward(x, w_fe, b_fe, ln_gamma, ln_beta, w_fc, b_fc)
    jax.block_until_ready((feats, c))

    feats_ref, c_ref = _reference(x, w_fe, b_fe, ln_gamma, ln_beta, w_fc, b_fc)
    assert feats.shape == (N, FEATURE_SIZE) and c.shape == (N, C)
    # bf16 matmul operands (f32 accumulation) => ~1% tolerance vs f32 reference.
    assert jnp.allclose(feats, feats_ref, atol=2e-2, rtol=2e-2)
    assert jnp.allclose(c, c_ref, atol=2e-2, rtol=2e-2)

    print("KERNEL_OK")
</pallas_src>

<mosaic_0001>
module attributes {stable_mosaic.version = 11 : i64} {
  func.func @_iclassifier_kernel(%arg0: i32, %arg1: memref<56x256xf32, #tpu.memory_space<vmem>>, %arg2: memref<256x512xbf16, #tpu.memory_space<vmem>>, %arg3: memref<3x512xf32, #tpu.memory_space<vmem>>, %arg4: memref<512x2xbf16, #tpu.memory_space<vmem>>, %arg5: memref<1x2xf32, #tpu.memory_space<vmem>>, %arg6: memref<56x512xf32, #tpu.memory_space<vmem>>, %arg7: memref<56x2xf32, #tpu.memory_space<vmem>>) attributes {dimension_semantics = [#tpu.dimension_semantics<parallel>], iteration_bounds = array<i64: 2>, scalar_prefetch = 0 : i64, scratch_operands = 0 : i64, tpu.core_type = #tpu.core_type<tc>, window_params = [{transform_indices = @transform_0, window_bounds = array<i64: 56, 256>}, {pipeline_mode = #tpu.pipeline_mode<synchronous>, transform_indices = @transform_1, window_bounds = array<i64: 256, 512>}, {pipeline_mode = #tpu.pipeline_mode<synchronous>, transform_indices = @transform_2, window_bounds = array<i64: 3, 512>}, {pipeline_mode = #tpu.pipeline_mode<synchronous>, transform_indices = @transform_3, window_bounds = array<i64: 512, 2>}, {pipeline_mode = #tpu.pipeline_mode<synchronous>, transform_indices = @transform_4, window_bounds = array<i64: 1, 2>}, {transform_indices = @transform_5, window_bounds = array<i64: 56, 512>}, {transform_indices = @transform_6, window_bounds = array<i64: 56, 2>}]} {
    %c0 = arith.constant 0 : index
    %c0_0 = arith.constant 0 : index
    %0 = vector.load %arg1[%c0, %c0_0] : memref<56x256xf32, #tpu.memory_space<vmem>>, vector<56x256xf32>
    %1 = arith.truncf %0 : vector<56x256xf32> to vector<56x256xbf16>
    %c0_1 = arith.constant 0 : index
    %c0_2 = arith.constant 0 : index
    %2 = vector.load %arg3[%c0_1, %c0_2] : memref<3x512xf32, #tpu.memory_space<vmem>>, vector<3x512xf32>
    %3 = vector.extract_strided_slice %2 {offsets = [0, 0], sizes = [1, 512], strides = [1, 1]} : vector<3x512xf32> to vector<1x512xf32>
    %4 = vector.extract_strided_slice %2 {offsets = [1, 0], sizes = [1, 512], strides = [1, 1]} : vector<3x512xf32> to vector<1x512xf32>
    %5 = vector.extract_strided_slice %2 {offsets = [2, 0], sizes = [1, 512], strides = [1, 1]} : vector<3x512xf32> to vector<1x512xf32>
    %c0_3 = arith.constant 0 : index
    %c0_4 = arith.constant 0 : index
    %6 = vector.load %arg2[%c0_3, %c0_4] : memref<256x512xbf16, #tpu.memory_space<vmem>>, vector<256x512xbf16>
    %cst = arith.constant dense<0.000000e+00> : vector<56x512xf32>
    %7 = tpu.matmul %1, %6, %cst {dimension_numbers = #tpu.dot_dimension_numbers<[1], [0], [0], [1], [0, 0, 1, 1], [], []>} : vector<56x256xbf16>, vector<256x512xbf16>, vector<56x512xf32> -> vector<56x512xf32>
    %8 = vector.broadcast %3 : vector<1x512xf32> to vector<56x512xf32>
    %9 = arith.addf %7, %8 : vector<56x512xf32>
    %cst_5 = arith.constant dense<0.000000e+00> : vector<56xf32>
    %10 = vector.multi_reduction <add>, %9, %cst_5 [1] : vector<56x512xf32> to vector<56xf32>
    %11 = vector.shape_cast %10 : vector<56xf32> to vector<56x1xf32>
    %cst_6 = arith.constant 0.001953125 : f32
    %12 = vector.broadcast %cst_6 : f32 to vector<56x1xf32>
    %13 = arith.mulf %11, %12 : vector<56x1xf32>
    %14 = arith.mulf %9, %9 : vector<56x512xf32>
    %cst_7 = arith.constant dense<0.000000e+00> : vector<56xf32>
    %15 = vector.multi_reduction <add>, %14, %cst_7 [1] : vector<56x512xf32> to vector<56xf32>
    %16 = vector.shape_cast %15 : vector<56xf32> to vector<56x1xf32>
    %cst_8 = arith.constant 0.001953125 : f32
    %17 = vector.broadcast %cst_8 : f32 to vector<56x1xf32>
    %18 = arith.mulf %16, %17 : vector<56x1xf32>
    %19 = arith.mulf %13, %13 : vector<56x1xf32>
    %20 = arith.subf %18, %19 : vector<56x1xf32>
    %cst_9 = arith.constant 9.99999974E-6 : f32
    %21 = vector.broadcast %cst_9 : f32 to vector<56x1xf32>
    %22 = arith.addf %20, %21 : vector<56x1xf32>
    %23 = math.rsqrt %22 : vector<56x1xf32>
    %24 = vector.broadcast %13 : vector<56x1xf32> to vector<56x512xf32>
    %25 = arith.subf %9, %24 : vector<56x512xf32>
    %26 = vector.broadcast %23 : vector<56x1xf32> to vector<56x512xf32>
    %27 = arith.mulf %25, %26 : vector<56x512xf32>
    %28 = vector.broadcast %4 : vector<1x512xf32> to vector<56x512xf32>
    %29 = arith.mulf %27, %28 : vector<56x512xf32>
    %30 = vector.broadcast %5 : vector<1x512xf32> to vector<56x512xf32>
    %31 = arith.addf %29, %30 : vector<56x512xf32>
    %c0_10 = arith.constant 0 : index
    %c0_11 = arith.constant 0 : index
    %32 = vector.load %arg6[%c0_10, %c0_11] : memref<56x512xf32, #tpu.memory_space<vmem>>, vector<56x512xf32>
    tpu.vector_store %arg6[%c0_10, %c0_11], %31 {strides = array<i32>} : memref<56x512xf32, #tpu.memory_space<vmem>>, vector<56x512xf32>,
    %33 = arith.truncf %31 : vector<56x512xf32> to vector<56x512xbf16>
    %c0_12 = arith.constant 0 : index
    %c0_13 = arith.constant 0 : index
    %34 = vector.load %arg4[%c0_12, %c0_13] : memref<512x2xbf16, #tpu.memory_space<vmem>>, vector<512x2xbf16>
    %cst_14 = arith.constant dense<0.000000e+00> : vector<56x2xf32>
    %35 = tpu.matmul %33, %34, %cst_14 {dimension_numbers = #tpu.dot_dimension_numbers<[1], [0], [0], [1], [0, 0, 1, 1], [], []>} : vector<56x512xbf16>, vector<512x2xbf16>, vector<56x2xf32> -> vector<56x2xf32>
    %c0_15 = arith.constant 0 : index
    %c0_16 = arith.constant 0 : index
    %36 = vector.load %arg5[%c0_15, %c0_16] : memref<1x2xf32, #tpu.memory_space<vmem>>, vector<1x2xf32>
    %37 = vector.broadcast %36 : vector<1x2xf32> to vector<56x2xf32>
    %38 = arith.addf %35, %37 : vector<56x2xf32>
    %c0_17 = arith.constant 0 : index
    %c0_18 = arith.constant 0 : index
    %39 = vector.load %arg7[%c0_17, %c0_18] : memref<56x2xf32, #tpu.memory_space<vmem>>, vector<56x2xf32>
    tpu.vector_store %arg7[%c0_17, %c0_18], %38 {strides = array<i32>} : memref<56x2xf32, #tpu.memory_space<vmem>>, vector<56x2xf32>,
    return
  }
  func.func @transform_0(%arg0: i32) -> (i32, i32) {
    %c0_i32 = arith.constant 0 : i32
    %c0_i32_0 = arith.constant 0 : i32
    return %arg0, %c0_i32 : i32, i32
  }
  func.func @transform_1(%arg0: i32) -> (i32, i32) {
    %c0_i32 = arith.constant 0 : i32
    %c0_i32_0 = arith.constant 0 : i32
    %c0_i32_1 = arith.constant 0 : i32
    return %c0_i32, %c0_i32_0 : i32, i32
  }
  func.func @transform_2(%arg0: i32) -> (i32, i32) {
    %c0_i32 = arith.constant 0 : i32
    %c0_i32_0 = arith.constant 0 : i32
    %c0_i32_1 = arith.constant 0 : i32
    return %c0_i32, %c0_i32_0 : i32, i32
  }
  func.func @transform_3(%arg0: i32) -> (i32, i32) {
    %c0_i32 = arith.constant 0 : i32
    %c0_i32_0 = arith.constant 0 : i32
    %c0_i32_1 = arith.constant 0 : i32
    return %c0_i32, %c0_i32_0 : i32, i32
  }
  func.func @transform_4(%arg0: i32) -> (i32, i32) {
    %c0_i32 = arith.constant 0 : i32
    %c0_i32_0 = arith.constant 0 : i32
    %c0_i32_1 = arith.constant 0 : i32
    return %c0_i32, %c0_i32_0 : i32, i32
  }
  func.func @transform_5(%arg0: i32) -> (i32, i32) {
    %c0_i32 = arith.constant 0 : i32
    %c0_i32_0 = arith.constant 0 : i32
    return %arg0, %c0_i32 : i32, i32
  }
  func.func @transform_6(%arg0: i32) -> (i32, i32) {
    %c0_i32 = arith.constant 0 : i32
    %c0_i32_0 = arith.constant 0 : i32
    return %arg0, %c0_i32 : i32, i32
  }
}

</mosaic_0001>

<llo_original>
// kernel: tpu_custom_call.1
$region0: #{tpu_custom_call.1}
  #allocation0 [shape = 'u32[]', space=smem, size = 0x4, offset = 0x4, fixed_abs, tag = 'smem constant byte address 0x4 - core index']
  #allocation1 [shape = 'u32[72,128]{1,0:T(1,128)}', space=vmem, size = 0x9000, scoped, tag = 'internal scratch']
  %s0 = inlined_call_operand.vmem [shape: f32[112,256], index: 0, kind: input, shape index: {}]
  %s1 = inlined_call_operand.hbm [shape: bf16[256,512], index: 1, kind: input, shape index: {}]
  %s2 = inlined_call_operand.vmem [shape: f32[3,512], index: 2, kind: input, shape index: {}]
  %s3 = inlined_call_operand.vmem [shape: bf16[512,2], index: 3, kind: input, shape index: {}]
  %s4 = inlined_call_operand.vmem [shape: f32[1,2], index: 4, kind: input, shape index: {}]
  %s5 = inlined_call_operand.hbm [shape: f32[112,512], index: 5, kind: output, shape index: {0}]
  %s6 = inlined_call_operand.vmem [shape: f32[112,2], index: 6, kind: output, shape index: {1}]
  %7 = xla_tuple %s5, %s6
  %s8 = sld [smem:[#allocation0]]
  $region65: #{tpu_custom_call.1} parent=0
    _
  %s10 = ssub.s32 1, %s8
  %s11 = scalar_select 0, %s10, %s8
  $region1: #{tpu_custom_call.1} parent=0
    #allocation2 [shape = 'u8[262144]{0}', space=vmem, size = 0x40000, scoped, tag = 'input window, operand 1, single buffered']
    #allocation3 [shape = 's32[2]{0}', space=sflag, size = 0x8, scoped, tag = 'scoped memory for tpu_custom_call.1']
    #allocation4 [shape = 's32[2]{0}', space=sflag, size = 0x8, scoped, tag = 'scoped memory for tpu_custom_call.1']
    #allocation5 [shape = 'u8[229376]{0}', space=vmem, size = 0x38000, scoped, tag = 'output window, operand 0']
    %12 = vsyncpa [#allocation3], 0
    %13 = vsyncpa [#allocation4], 0
    %s14 = scalar_lea.sflag [#allocation4], 1
    %15 = vsyncpa %s14, 0
    loop: start=0, step=1, limit=4
    $region2: #{tpu_custom_call.1} parent=1 // loop_pre_header
      _
    $region3: #{tpu_custom_call.1} parent=1 // loop_header
      %s17 = sphi 0, %s21
      %p18 = scmp.ge.s32.totalorder %s17, 4
      %s27 = sphi 0, %s29
      %s30 = sphi 0, %s27
      %s31 = sphi 0, %s30
      %s47 = sphi 0, %s31
      %s51 = sphi 0, %s51
      %s53 = sphi 0, %s51
      %s54 = sphi 0, %s53
      %s68 = sphi 0, %s54
      %s72 = sphi 0, %s72
      %s74 = sphi 0, %s72
      %s75 = sphi 0, %s74
      %s89 = sphi 0, %s75
      %s93 = sphi 0, %s93
      %s95 = sphi 0, %s93
      %s96 = sphi 0, %s95
      %s110 = sphi 0, %s96
      %s114 = sphi 0, %s114
      %s116 = sphi 0, %s114
      %s117 = sphi 0, %s116
      %s131 = sphi 0, %s117
      %s137 = sphi 0, %s139
      %s140 = sphi 0, %s137
      %s141 = sphi 0, %s140
      %s157 = sphi 0, %s141
      %s163 = sphi 0, %s165
      %s166 = sphi 0, %s163
      %s167 = sphi 0, %s166
      %s183 = sphi 0, %s167
    $region4: #{tpu_custom_call.1} parent=1 // loop_header_branch
      %20 = sbr.rel (%p18) target = $region8
    $region5: #{tpu_custom_call.1} parent=1 // loop_body
      %s22 = ssub.s32 %s17, 1
      %s23 = ssub.s32 %s17, 2
      %s24 = sadd.s32 %s17, 1
      %s25 = ssub.s32 %s17, %s24
      %p26 = scmp.eq.s32.totalorder %s25, 0
      %s28 = sadd.s32 %s27, 1
      %s29 = scalar_select %p26, %s27, %s28
      %p32 = pneg %p26
      %p33 = scmp.eq.s32.totalorder %s17, 1
      %p34 = por %p32, %p33
      %p35 = scmp.ne.s32.totalorder %s27, %s30
      %p36 = scmp.eq.s32.totalorder %s17, 0
      %p37 = por %p35, %p36
      %p38 = scmp.ne.s32.totalorder %s27, %s30
      %p39 = scmp.eq.s32.totalorder %s22, 1
      %p40 = por %p38, %p39
      %p41 = scmp.ne.s32.totalorder %s30, %s31
      %p42 = scmp.eq.s32.totalorder %s22, 0
      %p43 = por %p41, %p42
      %p44 = scmp.ne.s32.totalorder %s30, %s31
      %p45 = scmp.eq.s32.totalorder %s23, 1
      %p46 = por %p44, %p45
      %p48 = scmp.ne.s32.totalorder %s31, %s47
      %p49 = scmp.eq.s32.totalorder %s23, 0
      %p50 = por %p48, %p49
      %s52 = sadd.s32 %s51, 1
      %p55 = scmp.eq.s32.totalorder %s17, 1
      %p56 = scmp.ne.s32.totalorder %s51, %s53
      %p57 = scmp.eq.s32.totalorder %s17, 0
      %p58 = por %p56, %p57
      %p59 = scmp.ne.s32.totalorder %s51, %s53
      %p60 = scmp.eq.s32.totalorder %s22, 1
      %p61 = por %p59, %p60
      %p62 = scmp.ne.s32.totalorder %s53, %s54
      %p63 = scmp.eq.s32.totalorder %s22, 0
      %p64 = por %p62, %p63
      %p65 = scmp.ne.s32.totalorder %s53, %s54
      %p66 = scmp.eq.s32.totalorder %s23, 1
      %p67 = por %p65, %p66
      %p69 = scmp.ne.s32.totalorder %s54, %s68
      %p70 = scmp.eq.s32.totalorder %s23, 0
      %p71 = por %p69, %p70
      %s73 = sadd.s32 %s72, 1
      %p76 = scmp.eq.s32.totalorder %s17, 1
      %p77 = scmp.ne.s32.totalorder %s72, %s74
      %p78 = scmp.eq.s32.totalorder %s17, 0
      %p79 = por %p77, %p78
      %p80 = scmp.ne.s32.totalorder %s72, %s74
      %p81 = scmp.eq.s32.totalorder %s22, 1
      %p82 = por %p80, %p81
      %p83 = scmp.ne.s32.totalorder %s74, %s75
      %p84 = scmp.eq.s32.totalorder %s22, 0
      %p85 = por %p83, %p84
      %p86 = scmp.ne.s32.totalorder %s74, %s75
      %p87 = scmp.eq.s32.totalorder %s23, 1
      %p88 = por %p86, %p87
      %p90 = scmp.ne.s32.totalorder %s75, %s89
      %p91 = scmp.eq.s32.totalorder %s23, 0
      %p92 = por %p90, %p91
      %s94 = sadd.s32 %s93, 1
      %p97 = scmp.eq.s32.totalorder %s17, 1
      %p98 = scmp.ne.s32.totalorder %s93, %s95
      %p99 = scmp.eq.s32.totalorder %s17, 0
      %p100 = por %p98, %p99
      %p101 = scmp.ne.s32.totalorder %s93, %s95
      %p102 = scmp.eq.s32.totalorder %s22, 1
      %p103 = por %p101, %p102
      %p104 = scmp.ne.s32.totalorder %s95, %s96
      %p105 = scmp.eq.s32.totalorder %s22, 0
      %p106 = por %p104, %p105
      %p107 = scmp.ne.s32.totalorder %s95, %s96
      %p108 = scmp.eq.s32.totalorder %s23, 1
      %p109 = por %p107, %p108
      %p111 = scmp.ne.s32.totalorder %s96, %s110
      %p112 = scmp.eq.s32.totalorder %s23, 0
      %p113 = por %p111, %p112
      %s115 = sadd.s32 %s114, 1
      %p118 = scmp.eq.s32.totalorder %s17, 1
      %p119 = scmp.ne.s32.totalorder %s114, %s116
      %p120 = scmp.eq.s32.totalorder %s17, 0
      %p121 = por %p119, %p120
      %p122 = scmp.ne.s32.totalorder %s114, %s116
      %p123 = scmp.eq.s32.totalorder %s22, 1
      %p124 = por %p122, %p123
      %p125 = scmp.ne.s32.totalorder %s116, %s117
      %p126 = scmp.eq.s32.totalorder %s22, 0
      %p127 = por %p125, %p126
      %p128 = scmp.ne.s32.totalorder %s116, %s117
      %p129 = scmp.eq.s32.totalorder %s23, 1
      %p130 = por %p128, %p129
      %p132 = scmp.ne.s32.totalorder %s117, %s131
      %p133 = scmp.eq.s32.totalorder %s23, 0
      %p134 = por %p132, %p133
      %s135 = ssub.s32 %s17, %s24
      %p136 = scmp.eq.s32.totalorder %s135, 0
      %s138 = sadd.s32 %s137, 1
      %s139 = scalar_select %p136, %s137, %s138
      %p142 = pneg %p136
      %p143 = scmp.eq.s32.totalorder %s17, 1
      %p144 = por %p142, %p143
      %p145 = scmp.ne.s32.totalorder %s137, %s140
      %p146 = scmp.eq.s32.totalorder %s17, 0
      %p147 = por %p145, %p146
      %p148 = scmp.ne.s32.totalorder %s137, %s140
      %p149 = scmp.eq.s32.totalorder %s22, 1
      %p150 = por %p148, %p149
      %p151 = scmp.ne.s32.totalorder %s140, %s141
      %p152 = scmp.eq.s32.totalorder %s22, 0
      %p153 = por %p151, %p152
      %p154 = scmp.ne.s32.totalorder %s140, %s141
      %p155 = scmp.eq.s32.totalorder %s23, 1
      %p156 = por %p154, %p155
      %p158 = scmp.ne.s32.totalorder %s141, %s157
      %p159 = scmp.eq.s32.totalorder %s23, 0
      %p160 = por %p158, %p159
      %s161 = ssub.s32 %s17, %s24
      %p162 = scmp.eq.s32.totalorder %s161, 0
      %s164 = sadd.s32 %s163, 1
      %s165 = scalar_select %p162, %s163, %s164
      %p168 = pneg %p162
      %p169 = scmp.eq.s32.totalorder %s17, 1
      %p170 = por %p168, %p169
      %p171 = scmp.ne.s32.totalorder %s163, %s166
      %p172 = scmp.eq.s32.totalorder %s17, 0
      %p173 = por %p171, %p172
      %p174 = scmp.ne.s32.totalorder %s163, %s166
      %p175 = scmp.eq.s32.totalorder %s22, 1
      %p176 = por %p174, %p175
      %p177 = scmp.ne.s32.totalorder %s166, %s167
      %p178 = scmp.eq.s32.totalorder %s22, 0
      %p179 = por %p177, %p178
      %p180 = scmp.ne.s32.totalorder %s166, %s167
      %p181 = scmp.eq.s32.totalorder %s23, 1
      %p182 = por %p180, %p181
      %p184 = scmp.ne.s32.totalorder %s167, %s183
      %p185 = scmp.eq.s32.totalorder %s23, 0
      %p186 = por %p184, %p185
      %p187 = scmp.le.s32.totalorder 1, %s17
      %p188 = scmp.lt.s32.totalorder %s17, 3
      %p189 = pnand %p187, %p188
      %p190 = pneg %p189
      // Predicated region
      $region9: #{tpu_custom_call.1} parent=5 // pred_check
        _
      $region10: #{tpu_custom_call.1} parent=5 // pred_check_branch
        %192 = sbr.rel (%p189) target = $region12
      $region11: #{tpu_custom_call.1} parent=5 // pred_region
        %s193 = ssub.s32 %s17, 1
        // Predicated region
        $region13: #{tpu_custom_call.1} parent=11 // pred_check
          %p194 = pneg %p64
        $region14: #{tpu_custom_call.1} parent=11 // pred_check_branch
          %196 = sbr.rel (%p194) target = $region16
        $region15: #{tpu_custom_call.1} parent=11 // pred_region
          %198 = vsyncadd [#allocation3], 0
          %s199 = sshll.u32 %s1, 4
          %s200 = int_to_ptr.hbm [resolvable:$true] %s199
          %s201 = sshll.u32 [#allocation2], 4
          %s202 = int_to_ptr.vmem [resolvable:$true] %s201
          %207 = dma.hbm_to_vmem [thread:$0]  %s200, 8192, %s202, [#allocation3], 256, 256, 16
        $region16: #{tpu_custom_call.1} parent=11 // pred_fallthru
          _
        // Predicated region
        $region17: #{tpu_custom_call.1} parent=11 // pred_check
          %p208 = pneg %p85
        $region18: #{tpu_custom_call.1} parent=11 // pred_check_branch
          %210 = sbr.rel (%p208) target = $region20
        $region19: #{tpu_custom_call.1} parent=11 // pred_region
          _
        $region20: #{tpu_custom_call.1} parent=11 // pred_fallthru
          _
        // Predicated region
        $region21: #{tpu_custom_call.1} parent=11 // pred_check
          %p211 = pneg %p106
        $region22: #{tpu_custom_call.1} parent=11 // pred_check_branch
          %213 = sbr.rel (%p211) target = $region24
        $region23: #{tpu_custom_call.1} parent=11 // pred_region
          _
        $region24: #{tpu_custom_call.1} parent=11 // pred_fallthru
          _
        // Predicated region
        $region25: #{tpu_custom_call.1} parent=11 // pred_check
          %p214 = pneg %p127
        $region26: #{tpu_custom_call.1} parent=11 // pred_check_branch
          %216 = sbr.rel (%p214) target = $region28
        $region27: #{tpu_custom_call.1} parent=11 // pred_region
          _
        $region28: #{tpu_custom_call.1} parent=11 // pred_fallthru
          _
      $region12: #{tpu_custom_call.1} parent=5 // pred_fallthru
        _
      %p217 = scmp.lt.s32.totalorder %s17, 2
      // Predicated region
      $region29: #{tpu_custom_call.1} parent=5 // pred_check
        %p218 = pneg %p217
      $region30: #{tpu_custom_call.1} parent=5 // pred_check_branch
        %220 = sbr.rel (%p218) target = $region32
      $region31: #{tpu_custom_call.1} parent=5 // pred_region
        // Predicated region
        $region33: #{tpu_custom_call.1} parent=31 // pred_check
          %p221 = pneg %p37
        $region34: #{tpu_custom_call.1} parent=31 // pred_check_branch
          %223 = sbr.rel (%p221) target = $region36
        $region35: #{tpu_custom_call.1} parent=31 // pred_region
          %s224 = smul.u32 7, %s17
          %p225 = scmp.lt.s32.totalorder %s224, 13
          %s226 = scalar_select %p225, %s224, 13
          %s227 = smul.addr %s226, 2
          %s228 = smul.addr %s227, 8
          %s229 = scalar_lea.vmem %s0, %s228
          %s230 = smul.u32 7, %s17
        $region36: #{tpu_custom_call.1} parent=31 // pred_fallthru
          _
      $region32: #{tpu_custom_call.1} parent=5 // pred_fallthru
        _
      %p231 = scmp.le.s32.totalorder 1, %s17
      %p232 = scmp.lt.s32.totalorder %s17, 3
      %p233 = pnand %p231, %p232
      %p234 = pneg %p233
      // Predicated region
      $region37: #{tpu_custom_call.1} parent=5 // pred_check
        _
      $region38: #{tpu_custom_call.1} parent=5 // pred_check_branch
        %236 = sbr.rel (%p233) target = $region40
      $region39: #{tpu_custom_call.1} parent=5 // pred_region
        %s237 = ssub.s32 %s17, 1
        // Predicated region
        $region41: #{tpu_custom_call.1} parent=39 // pred_check
          %p238 = pneg %p64
        $region42: #{tpu_custom_call.1} parent=39 // pred_check_branch
          %240 = sbr.rel (%p238) target = $region44
        $region43: #{tpu_custom_call.1} parent=39 // pred_region
          %242 = dma.done [#allocation3], 8192
        $region44: #{tpu_custom_call.1} parent=39 // pred_fallthru
          _
        %s243 = smul.u32 7, %s22
        %p244 = scmp.lt.s32.totalorder %s243, 13
        %s245 = scalar_select %p244, %s243, 13
        %s246 = smul.addr %s245, 2
        %s247 = smul.addr %s246, 8
        %s248 = scalar_lea.vmem %s0, %s247
        %p249 = pneg %p43
        %p250 = pneg %p40
        %p251 = pneg %p64
        %p252 = pneg %p61
        %p253 = pneg %p85
        %p254 = pneg %p82
        %p255 = pneg %p106
        %p256 = pneg %p103
        %p257 = pneg %p127
        %p258 = pneg %p124
        %p259 = pneg %p153
        %p260 = pneg %p150
        %s261 = sand.u32 %s140, 1
        %s262 = scalar_lea.sflag [#allocation4], %s261
        %s263 = sand.u32 %s140, 1
        %s264 = smul.addr %s263, 224
        %s265 = scalar_lea.vmem [#allocation5], %s264
        %p266 = pneg %p179
        %p267 = pneg %p176
        %s268 = smul.u32 7, %s22
        %p269 = scmp.lt.s32.totalorder %s268, 13
        %s270 = scalar_select %p269, %s268, 13
        %s271 = smul.addr %s270, 8
        %s272 = scalar_lea.vmem %s6, %s271
        %s273 = smul.u32 7, %s22
        %p274 = scmp.lt.s32.totalorder %s273, 13
        %s275 = scalar_select %p274, %s273, 13
        %s276 = smul.addr %s275, 2
        %s277 = smul.addr %s276, 8
        %s278 = scalar_lea.vmem %s0, %s277
        %s279 = smul.u32 7, %s22
        %s280 = smul.u32 7, %s22
        %s281 = smul.u32 7, %s22
        %p282 = scmp.lt.s32.totalorder %s281, 13
        %s283 = scalar_select %p282, %s281, 13
        %s284 = smul.addr %s283, 8
        %s285 = scalar_lea.vmem %s6, %s284
        %s286 = smul.u32 7, %s22
        %v287 = vld [vmem:[%s278] sm:$0xff]
        %v288 = vld [vmem:[%s278 + $0x8] sm:$0xff]
        %v289 = vld [vmem:[%s278 + $0x10] sm:$0xff]
        %v290 = vld [vmem:[%s278 + $0x18] sm:$0xff]
        %v291 = vld [vmem:[%s278 + $0x20] sm:$0xff]
        %v292 = vld [vmem:[%s278 + $0x28] sm:$0xff]
        %v293 = vld [vmem:[%s278 + $0x30] sm:$0xff]
        %v294 = vld [vmem:[%s278 + $0x38] sm:$0xff]
        %v295 = vld [vmem:[%s278 + $0x40] sm:$0xff]
        %v296 = vld [vmem:[%s278 + $0x48] sm:$0xff]
        %v297 = vld [vmem:[%s278 + $0x50] sm:$0xff]
        %v298 = vld [vmem:[%s278 + $0x58] sm:$0xff]
        %v299 = vld [vmem:[%s278 + $0x60] sm:$0xff]
        %v300 = vld [vmem:[%s278 + $0x68] sm:$0xff]
        %v301 = vpack.c.bf16 %v289, %v287
        %v302 = vpack.c.bf16 %v290, %v288
        %v303 = vpack.c.bf16 %v293, %v291
        %v304 = vpack.c.bf16 %v294, %v292
        %v305 = vpack.c.bf16 %v297, %v295
        %v306 = vpack.c.bf16 %v298, %v296
        %v307 = vpack.c.bf16 %v299, %v299
        %v308 = vpack.c.bf16 %v300, %v300
        %v309 = vld [vmem:[%s2] sm:$0x77]
        %v310 = vld [vmem:[%s2 + $0x8] sm:$0x77]
        %v311 = vld [vmem:[#allocation2] sm:$0xff]
        %v312 = vld [vmem:[#allocation2 + $0x8] sm:$0xff]
        %v313 = vld [vmem:[#allocation2 + $0x10] sm:$0xff]
        %v314 = vld [vmem:[#allocation2 + $0x18] sm:$0xff]
        %v315 = vld [vmem:[#allocation2 + $0x20] sm:$0xff]
        %v316 = vld [vmem:[#allocation2 + $0x28] sm:$0xff]
        %v317 = vld [vmem:[#allocation2 + $0x30] sm:$0xff]
        %v318 = vld [vmem:[#allocation2 + $0x38] sm:$0xff]
        %v319 = vld [vmem:[#allocation2 + $0x40] sm:$0xff]
        %v320 = vld [vmem:[#allocation2 + $0x48] sm:$0xff]
        %v321 = vld [vmem:[#allocation2 + $0x50] sm:$0xff]
        %v322 = vld [vmem:[#allocation2 + $0x58] sm:$0xff]
        %v323 = vld [vmem:[#allocation2 + $0x60] sm:$0xff]
        %v324 = vld [vmem:[#allocation2 + $0x68] sm:$0xff]
        %v325 = vld [vmem:[#allocation2 + $0x70] sm:$0xff]
        %v326 = vld [vmem:[#allocation2 + $0x78] sm:$0xff]
        %v327 = vld [vmem:[#allocation2 + $0x80] sm:$0xff]
        %v328 = vld [vmem:[#allocation2 + $0x88] sm:$0xff]
        %v329 = vld [vmem:[#allocation2 + $0x90] sm:$0xff]
        %v330 = vld [vmem:[#allocation2 + $0x98] sm:$0xff]
        %v331 = vld [vmem:[#allocation2 + $0xa0] sm:$0xff]
        %v332 = vld [vmem:[#allocation2 + $0xa8] sm:$0xff]
        %v333 = vld [vmem:[#allocation2 + $0xb0] sm:$0xff]
        %v334 = vld [vmem:[#allocation2 + $0xb8] sm:$0xff]
        %v335 = vld [vmem:[#allocation2 + $0xc0] sm:$0xff]
        %v336 = vld [vmem:[#allocation2 + $0xc8] sm:$0xff]
        %v337 = vld [vmem:[#allocation2 + $0xd0] sm:$0xff]
        %v338 = vld [vmem:[#allocation2 + $0xd8] sm:$0xff]
        %v339 = vld [vmem:[#allocation2 + $0xe0] sm:$0xff]
        %v340 = vld [vmem:[#allocation2 + $0xe8] sm:$0xff]
        %v341 = vld [vmem:[#allocation2 + $0xf0] sm:$0xff]
        %v342 = vld [vmem:[#allocation2 + $0xf8] sm:$0xff]
        %v343 = vld [vmem:[#allocation2 + $0x100] sm:$0xff]
        %v344 = vld [vmem:[#allocation2 + $0x108] sm:$0xff]
        %v345 = vld [vmem:[#allocation2 + $0x110] sm:$0xff]
        %v346 = vld [vmem:[#allocation2 + $0x118] sm:$0xff]
        %v347 = vld [vmem:[#allocation2 + $0x120] sm:$0xff]
        %v348 = vld [vmem:[#allocation2 + $0x128] sm:$0xff]
        %v349 = vld [vmem:[#allocation2 + $0x130] sm:$0xff]
        %v350 = vld [vmem:[#allocation2 + $0x138] sm:$0xff]
        %v351 = vld [vmem:[#allocation2 + $0x140] sm:$0xff]
        %v352 = vld [vmem:[#allocation2 + $0x148] sm:$0xff]
        %v353 = vld [vmem:[#allocation2 + $0x150] sm:$0xff]
        %v354 = vld [vmem:[#allocation2 + $0x158] sm:$0xff]
        %v355 = vld [vmem:[#allocation2 + $0x160] sm:$0xff]
        %v356 = vld [vmem:[#allocation2 + $0x168] sm:$0xff]
        %v357 = vld [vmem:[#allocation2 + $0x170] sm:$0xff]
        %v358 = vld [vmem:[#allocation2 + $0x178] sm:$0xff]
        %v359 = vld [vmem:[#allocation2 + $0x180] sm:$0xff]
        %v360 = vld [vmem:[#allocation2 + $0x188] sm:$0xff]
        %v361 = vld [vmem:[#allocation2 + $0x190] sm:$0xff]
        %v362 = vld [vmem:[#allocation2 + $0x198] sm:$0xff]
        %v363 = vld [vmem:[#allocation2 + $0x1a0] sm:$0xff]
        %v364 = vld [vmem:[#allocation2 + $0x1a8] sm:$0xff]
        %v365 = vld [vmem:[#allocation2 + $0x1b0] sm:$0xff]
        %v366 = vld [vmem:[#allocation2 + $0x1b8] sm:$0xff]
        %v367 = vld [vmem:[#allocation2 + $0x1c0] sm:$0xff]
        %v368 = vld [vmem:[#allocation2 + $0x1c8] sm:$0xff]
        %v369 = vld [vmem:[#allocation2 + $0x1d0] sm:$0xff]
        %v370 = vld [vmem:[#allocation2 + $0x1d8] sm:$0xff]
        %v371 = vld [vmem:[#allocation2 + $0x1e0] sm:$0xff]
        %v372 = vld [vmem:[#allocation2 + $0x1e8] sm:$0xff]
        %v373 = vld [vmem:[#allocation2 + $0x1f0] sm:$0xff]
        %v374 = vld [vmem:[#allocation2 + $0x1f8] sm:$0xff]
        %v377 = vperm.slane %v309, 0
        %v378 = vperm.slane %v309, 4
        %v379 = vperm.slane %v310, 0
        %v380 = vperm.slane %v310, 4
        %v385 = vperm.slane %v377, 0
        %v386 = vperm.slane %v378, 0
        %v387 = vperm.slane %v379, 0
        %v388 = vperm.slane %v380, 0
        %v453 = vunpack.c.l.b16 %v311
        %v454 = vunpack.c.h.b16 %v311
        %v455 = vunpack.c.l.b16 %v312
        %v456 = vunpack.c.h.b16 %v312
        %v457 = vunpack.c.l.b16 %v313
        %v458 = vunpack.c.h.b16 %v313
        %v459 = vunpack.c.l.b16 %v314
        %v460 = vunpack.c.h.b16 %v314
        %v461 = vunpack.c.l.b16 %v315
        %v462 = vunpack.c.h.b16 %v315
        %v463 = vunpack.c.l.b16 %v316
        %v464 = vunpack.c.h.b16 %v316
        %v465 = vunpack.c.l.b16 %v317
        %v466 = vunpack.c.h.b16 %v317
        %v467 = vunpack.c.l.b16 %v318
        %v468 = vunpack.c.h.b16 %v318
        %v469 = vunpack.c.l.b16 %v319
        %v470 = vunpack.c.h.b16 %v319
        %v471 = vunpack.c.l.b16 %v320
        %v472 = vunpack.c.h.b16 %v320
        %v473 = vunpack.c.l.b16 %v321
        %v474 = vunpack.c.h.b16 %v321
        %v475 = vunpack.c.l.b16 %v322
        %v476 = vunpack.c.h.b16 %v322
        %v477 = vunpack.c.l.b16 %v323
        %v478 = vunpack.c.h.b16 %v323
        %v479 = vunpack.c.l.b16 %v324
        %v480 = vunpack.c.h.b16 %v324
        %v481 = vunpack.c.l.b16 %v325
        %v482 = vunpack.c.h.b16 %v325
        %v483 = vunpack.c.l.b16 %v326
        %v484 = vunpack.c.h.b16 %v326
        %v485 = vunpack.c.l.b16 %v327
        %v486 = vunpack.c.h.b16 %v327
        %v487 = vunpack.c.l.b16 %v328
        %v488 = vunpack.c.h.b16 %v328
        %v489 = vunpack.c.l.b16 %v329
        %v490 = vunpack.c.h.b16 %v329
        %v491 = vunpack.c.l.b16 %v330
        %v492 = vunpack.c.h.b16 %v330
        %v493 = vunpack.c.l.b16 %v331
        %v494 = vunpack.c.h.b16 %v331
        %v495 = vunpack.c.l.b16 %v332
        %v496 = vunpack.c.h.b16 %v332
        %v497 = vunpack.c.l.b16 %v333
        %v498 = vunpack.c.h.b16 %v333
        %v499 = vunpack.c.l.b16 %v334
        %v500 = vunpack.c.h.b16 %v334
        %v501 = vunpack.c.l.b16 %v335
        %v502 = vunpack.c.h.b16 %v335
        %v503 = vunpack.c.l.b16 %v336
        %v504 = vunpack.c.h.b16 %v336
        %v505 = vunpack.c.l.b16 %v337
        %v506 = vunpack.c.h.b16 %v337
        %v507 = vunpack.c.l.b16 %v338
        %v508 = vunpack.c.h.b16 %v338
        %v509 = vunpack.c.l.b16 %v339
        %v510 = vunpack.c.h.b16 %v339
        %v511 = vunpack.c.l.b16 %v340
        %v512 = vunpack.c.h.b16 %v340
        %v513 = vunpack.c.l.b16 %v341
        %v514 = vunpack.c.h.b16 %v341
        %v515 = vunpack.c.l.b16 %v342
        %v516 = vunpack.c.h.b16 %v342
        %v517 = vunpack.c.l.b16 %v343
        %v518 = vunpack.c.h.b16 %v343
        %v519 = vunpack.c.l.b16 %v344
        %v520 = vunpack.c.h.b16 %v344
        %v521 = vunpack.c.l.b16 %v345
        %v522 = vunpack.c.h.b16 %v345
        %v523 = vunpack.c.l.b16 %v346
        %v524 = vunpack.c.h.b16 %v346
        %v525 = vunpack.c.l.b16 %v347
        %v526 = vunpack.c.h.b16 %v347
        %v527 = vunpack.c.l.b16 %v348
        %v528 = vunpack.c.h.b16 %v348
        %v529 = vunpack.c.l.b16 %v349
        %v530 = vunpack.c.h.b16 %v349
        %v531 = vunpack.c.l.b16 %v350
        %v532 = vunpack.c.h.b16 %v350
        %v533 = vunpack.c.l.b16 %v351
        %v534 = vunpack.c.h.b16 %v351
        %v535 = vunpack.c.l.b16 %v352
        %v536 = vunpack.c.h.b16 %v352
        %v537 = vunpack.c.l.b16 %v353
        %v538 = vunpack.c.h.b16 %v353
        %v539 = vunpack.c.l.b16 %v354
        %v540 = vunpack.c.h.b16 %v354
        %v541 = vunpack.c.l.b16 %v355
        %v542 = vunpack.c.h.b16 %v355
        %v543 = vunpack.c.l.b16 %v356
        %v544 = vunpack.c.h.b16 %v356
        %v545 = vunpack.c.l.b16 %v357
        %v546 = vunpack.c.h.b16 %v357
        %v547 = vunpack.c.l.b16 %v358
        %v548 = vunpack.c.h.b16 %v358
        %v549 = vunpack.c.l.b16 %v359
        %v550 = vunpack.c.h.b16 %v359
        %v551 = vunpack.c.l.b16 %v360
        %v552 = vunpack.c.h.b16 %v360
        %v553 = vunpack.c.l.b16 %v361
        %v554 = vunpack.c.h.b16 %v361
        %v555 = vunpack.c.l.b16 %v362
        %v556 = vunpack.c.h.b16 %v362
        %v557 = vunpack.c.l.b16 %v363
        %v558 = vunpack.c.h.b16 %v363
        %v559 = vunpack.c.l.b16 %v364
        %v560 = vunpack.c.h.b16 %v364
        %v561 = vunpack.c.l.b16 %v365
        %v562 = vunpack.c.h.b16 %v365
        %v563 = vunpack.c.l.b16 %v366
        %v564 = vunpack.c.h.b16 %v366
        %v565 = vunpack.c.l.b16 %v367
        %v566 = vunpack.c.h.b16 %v367
        %v567 = vunpack.c.l.b16 %v368
        %v568 = vunpack.c.h.b16 %v368
        %v569 = vunpack.c.l.b16 %v369
        %v570 = vunpack.c.h.b16 %v369
        %v571 = vunpack.c.l.b16 %v370
        %v572 = vunpack.c.h.b16 %v370
        %v573 = vunpack.c.l.b16 %v371
        %v574 = vunpack.c.h.b16 %v371
        %v575 = vunpack.c.l.b16 %v372
        %v576 = vunpack.c.h.b16 %v372
        %v577 = vunpack.c.l.b16 %v373
        %v578 = vunpack.c.h.b16 %v373
        %v579 = vunpack.c.l.b16 %v374
        %v580 = vunpack.c.h.b16 %v374
        %v581 = vpack.c.b16 %v457, %v453
        %v582 = vpack.c.b16 %v458, %v454
        %v583 = vpack.c.b16 %v459, %v455
        %v584 = vpack.c.b16 %v460, %v456
        %v585 = vpack.c.b16 %v465, %v461
        %v586 = vpack.c.b16 %v466, %v462
        %v587 = vpack.c.b16 %v467, %v463
        %v588 = vpack.c.b16 %v468, %v464
        %v589 = vpack.c.b16 %v473, %v469
        %v590 = vpack.c.b16 %v474, %v470
        %v591 = vpack.c.b16 %v475, %v471
        %v592 = vpack.c.b16 %v476, %v472
        %v593 = vpack.c.b16 %v481, %v477
        %v594 = vpack.c.b16 %v482, %v478
        %v595 = vpack.c.b16 %v483, %v479
        %v596 = vpack.c.b16 %v484, %v480
        %v597 = vpack.c.b16 %v489, %v485
        %v598 = vpack.c.b16 %v490, %v486
        %v599 = vpack.c.b16 %v491, %v487
        %v600 = vpack.c.b16 %v492, %v488
        %v601 = vpack.c.b16 %v497, %v493
        %v602 = vpack.c.b16 %v498, %v494
        %v603 = vpack.c.b16 %v499, %v495
        %v604 = vpack.c.b16 %v500, %v496
        %v605 = vpack.c.b16 %v505, %v501
        %v606 = vpack.c.b16 %v506, %v502
        %v607 = vpack.c.b16 %v507, %v503
        %v608 = vpack.c.b16 %v508, %v504
        %v609 = vpack.c.b16 %v513, %v509
        %v610 = vpack.c.b16 %v514, %v510
        %v611 = vpack.c.b16 %v515, %v511
        %v612 = vpack.c.b16 %v516, %v512
        %v613 = vpack.c.b16 %v521, %v517
        %v614 = vpack.c.b16 %v522, %v518
        %v615 = vpack.c.b16 %v523, %v519
        %v616 = vpack.c.b16 %v524, %v520
        %v617 = vpack.c.b16 %v529, %v525
        %v618 = vpack.c.b16 %v530, %v526
        %v619 = vpack.c.b16 %v531, %v527
        %v620 = vpack.c.b16 %v532, %v528
        %v621 = vpack.c.b16 %v537, %v533
        %v622 = vpack.c.b16 %v538, %v534
        %v623 = vpack.c.b16 %v539, %v535
        %v624 = vpack.c.b16 %v540, %v536
        %v625 = vpack.c.b16 %v545, %v541
        %v626 = vpack.c.b16 %v546, %v542
        %v627 = vpack.c.b16 %v547, %v543
        %v628 = vpack.c.b16 %v548, %v544
        %v629 = vpack.c.b16 %v553, %v549
        %v630 = vpack.c.b16 %v554, %v550
        %v631 = vpack.c.b16 %v555, %v551
        %v632 = vpack.c.b16 %v556, %v552
        %v633 = vpack.c.b16 %v561, %v557
        %v634 = vpack.c.b16 %v562, %v558
        %v635 = vpack.c.b16 %v563, %v559
        %v636 = vpack.c.b16 %v564, %v560
        %v637 = vpack.c.b16 %v569, %v565
        %v638 = vpack.c.b16 %v570, %v566
        %v639 = vpack.c.b16 %v571, %v567
        %v640 = vpack.c.b16 %v572, %v568
        %v641 = vpack.c.b16 %v577, %v573
        %v642 = vpack.c.b16 %v578, %v574
        %v643 = vpack.c.b16 %v579, %v575
        %v644 = vpack.c.b16 %v580, %v576
        %709 = vmatpush.bf16.msra.mxu0 %v609
        %710 = vmatpush.bf16.msra.mxu0 %v605
        %711 = vmatpush.bf16.msra.mxu0 %v601
        %712 = vmatpush.bf16.msra.mxu0 %v597
        %713 = vmatpush.bf16.msra.mxu0 %v593
        %714 = vmatpush.bf16.msra.mxu0 %v589
        %715 = vmatpush.bf16.msra.mxu0 %v585
        %716 = vmatpush.bf16.msra.mxu0 %v581
        %717 = vmatmul.bf16.gmra.mxu0 %v301
        %v718 = vpop.f32.mrf.mxu0
        %v719 = vadd.f32 %v385, %v718
        %v720 = vpop.f32.mrf.mxu0
        %v721 = vadd.f32 %v385, %v720
        %722 = vmatmul.bf16.gmra.mxu0 %v303
        %v723 = vpop.f32.mrf.mxu0
        %v724 = vadd.f32 %v385, %v723
        %v725 = vpop.f32.mrf.mxu0
        %v726 = vadd.f32 %v385, %v725
        %727 = vmatmul.bf16.gmra.mxu0 %v305
        %v728 = vpop.f32.mrf.mxu0
        %v729 = vadd.f32 %v385, %v728
        %v730 = vpop.f32.mrf.mxu0
        %v731 = vadd.f32 %v385, %v730
        %732 = vmatmul.bf16.gmra.mxu0 %v307
        %v733 = vpop.f32.mrf.mxu0
        %v734 = vadd.f32 %v385, %v733
        %v735 = vpop.f32.mrf.mxu0
        %736 = vdwg.mxu0
        %737 = vmatpush.bf16.msra.mxu0 %v641
        %738 = vmatpush.bf16.msra.mxu0 %v637
        %739 = vmatpush.bf16.msra.mxu0 %v633
        %740 = vmatpush.bf16.msra.mxu0 %v629
        %741 = vmatpush.bf16.msra.mxu0 %v625
        %742 = vmatpush.bf16.msra.mxu0 %v621
        %743 = vmatpush.bf16.msra.mxu0 %v617
        %744 = vmatpush.bf16.msra.mxu0 %v613
        %745 = vmatmul.bf16.gmra.mxu0 %v302
        %v746 = vpop.f32.mrf.mxu0
        %v747 = vadd.f32 %v719, %v746
        %v748 = vpop.f32.mrf.mxu0
        %v749 = vadd.f32 %v721, %v748
        %750 = vmatmul.bf16.gmra.mxu0 %v304
        %v751 = vpop.f32.mrf.mxu0
        %v752 = vadd.f32 %v724, %v751
        %v753 = vpop.f32.mrf.mxu0
        %v754 = vadd.f32 %v726, %v753
        %755 = vmatmul.bf16.gmra.mxu0 %v306
        %v756 = vpop.f32.mrf.mxu0
        %v757 = vadd.f32 %v729, %v756
        %v758 = vpop.f32.mrf.mxu0
        %v759 = vadd.f32 %v731, %v758
        %760 = vmatmul.bf16.gmra.mxu0 %v308
        %v761 = vpop.f32.mrf.mxu0
        %v762 = vadd.f32 %v734, %v761
        %v763 = vpop.f32.mrf.mxu0
        %764 = vdwg.mxu0
        %765 = vmatpush.bf16.msra.mxu0 %v610
        %766 = vmatpush.bf16.msra.mxu0 %v606
        %767 = vmatpush.bf16.msra.mxu0 %v602
        %768 = vmatpush.bf16.msra.mxu0 %v598
        %769 = vmatpush.bf16.msra.mxu0 %v594
        %770 = vmatpush.bf16.msra.mxu0 %v590
        %771 = vmatpush.bf16.msra.mxu0 %v586
        %772 = vmatpush.bf16.msra.mxu0 %v582
        %773 = vmatmul.bf16.gmra.mxu0 %v301
        %v774 = vpop.f32.mrf.mxu0
        %v775 = vadd.f32 %v386, %v774
        %v776 = vpop.f32.mrf.mxu0
        %v777 = vadd.f32 %v386, %v776
        %778 = vmatmul.bf16.gmra.mxu0 %v303
        %v779 = vpop.f32.mrf.mxu0
        %v780 = vadd.f32 %v386, %v779
        %v781 = vpop.f32.mrf.mxu0
        %v782 = vadd.f32 %v386, %v781
        %783 = vmatmul.bf16.gmra.mxu0 %v305
        %v784 = vpop.f32.mrf.mxu0
        %v785 = vadd.f32 %v386, %v784
        %v786 = vpop.f32.mrf.mxu0
        %v787 = vadd.f32 %v386, %v786
        %788 = vmatmul.bf16.gmra.mxu0 %v307
        %v789 = vpop.f32.mrf.mxu0
        %v790 = vadd.f32 %v386, %v789
        %v791 = vpop.f32.mrf.mxu0
        %792 = vdwg.mxu0
        %793 = vmatpush.bf16.msra.mxu0 %v642
        %794 = vmatpush.bf16.msra.mxu0 %v638
        %795 = vmatpush.bf16.msra.mxu0 %v634
        %796 = vmatpush.bf16.msra.mxu0 %v630
        %797 = vmatpush.bf16.msra.mxu0 %v626
        %798 = vmatpush.bf16.msra.mxu0 %v622
        %799 = vmatpush.bf16.msra.mxu0 %v618
        %800 = vmatpush.bf16.msra.mxu0 %v614
        %801 = vmatmul.bf16.gmra.mxu0 %v302
        %v802 = vpop.f32.mrf.mxu0
        %v803 = vadd.f32 %v775, %v802
        %v804 = vpop.f32.mrf.mxu0
        %v805 = vadd.f32 %v777, %v804
        %806 = vmatmul.bf16.gmra.mxu0 %v304
        %v807 = vpop.f32.mrf.mxu0
        %v808 = vadd.f32 %v780, %v807
        %v809 = vpop.f32.mrf.mxu0
        %v810 = vadd.f32 %v782, %v809
        %811 = vmatmul.bf16.gmra.mxu0 %v306
        %v812 = vpop.f32.mrf.mxu0
        %v813 = vadd.f32 %v785, %v812
        %v814 = vpop.f32.mrf.mxu0
        %v815 = vadd.f32 %v787, %v814
        %816 = vmatmul.bf16.gmra.mxu0 %v308
        %v817 = vpop.f32.mrf.mxu0
        %v818 = vadd.f32 %v790, %v817
        %v819 = vpop.f32.mrf.mxu0
        %820 = vdwg.mxu0
        %821 = vmatpush.bf16.msra.mxu0 %v611
        %822 = vmatpush.bf16.msra.mxu0 %v607
        %823 = vmatpush.bf16.msra.mxu0 %v603
        %824 = vmatpush.bf16.msra.mxu0 %v599
        %825 = vmatpush.bf16.msra.mxu0 %v595
        %826 = vmatpush.bf16.msra.mxu0 %v591
        %827 = vmatpush.bf16.msra.mxu0 %v587
        %828 = vmatpush.bf16.msra.mxu0 %v583
        %829 = vmatmul.bf16.gmra.mxu0 %v301
        %v830 = vpop.f32.mrf.mxu0
        %v831 = vadd.f32 %v387, %v830
        %v832 = vpop.f32.mrf.mxu0
        %v833 = vadd.f32 %v387, %v832
        %834 = vmatmul.bf16.gmra.mxu0 %v303
        %v835 = vpop.f32.mrf.mxu0
        %v836 = vadd.f32 %v387, %v835
        %v837 = vpop.f32.mrf.mxu0
        %v838 = vadd.f32 %v387, %v837
        %839 = vmatmul.bf16.gmra.mxu0 %v305
        %v840 = vpop.f32.mrf.mxu0
        %v841 = vadd.f32 %v387, %v840
        %v842 = vpop.f32.mrf.mxu0
        %v843 = vadd.f32 %v387, %v842
        %844 = vmatmul.bf16.gmra.mxu0 %v307
        %v845 = vpop.f32.mrf.mxu0
        %v846 = vadd.f32 %v387, %v845
        %v847 = vpop.f32.mrf.mxu0
        %848 = vdwg.mxu0
        %849 = vmatpush.bf16.msra.mxu0 %v643
        %850 = vmatpush.bf16.msra.mxu0 %v639
        %851 = vmatpush.bf16.msra.mxu0 %v635
        %852 = vmatpush.bf16.msra.mxu0 %v631
        %853 = vmatpush.bf16.msra.mxu0 %v627
        %854 = vmatpush.bf16.msra.mxu0 %v623
        %855 = vmatpush.bf16.msra.mxu0 %v619
        %856 = vmatpush.bf16.msra.mxu0 %v615
        %857 = vmatmul.bf16.gmra.mxu0 %v302
        %v858 = vpop.f32.mrf.mxu0
        %v859 = vadd.f32 %v831, %v858
        %v860 = vpop.f32.mrf.mxu0
        %v861 = vadd.f32 %v833, %v860
        %862 = vmatmul.bf16.gmra.mxu0 %v304
        %v863 = vpop.f32.mrf.mxu0
        %v864 = vadd.f32 %v836, %v863
        %v865 = vpop.f32.mrf.mxu0
        %v866 = vadd.f32 %v838, %v865
        %867 = vmatmul.bf16.gmra.mxu0 %v306
        %v868 = vpop.f32.mrf.mxu0
        %v869 = vadd.f32 %v841, %v868
        %v870 = vpop.f32.mrf.mxu0
        %v871 = vadd.f32 %v843, %v870
        %872 = vmatmul.bf16.gmra.mxu0 %v308
        %v873 = vpop.f32.mrf.mxu0
        %v874 = vadd.f32 %v846, %v873
        %v875 = vpop.f32.mrf.mxu0
        %876 = vdwg.mxu0
        %877 = vmatpush.bf16.msra.mxu0 %v612
        %878 = vmatpush.bf16.msra.mxu0 %v608
        %879 = vmatpush.bf16.msra.mxu0 %v604
        %880 = vmatpush.bf16.msra.mxu0 %v600
        %881 = vmatpush.bf16.msra.mxu0 %v596
        %882 = vmatpush.bf16.msra.mxu0 %v592
        %883 = vmatpush.bf16.msra.mxu0 %v588
        %884 = vmatpush.bf16.msra.mxu0 %v584
        %885 = vmatmul.bf16.gmra.mxu0 %v301
        %v886 = vpop.f32.mrf.mxu0
        %v887 = vadd.f32 %v388, %v886
        %v888 = vpop.f32.mrf.mxu0
        %v889 = vadd.f32 %v388, %v888
        %890 = vmatmul.bf16.gmra.mxu0 %v303
        %v891 = vpop.f32.mrf.mxu0
        %v892 = vadd.f32 %v388, %v891
        %v893 = vpop.f32.mrf.mxu0
        %v894 = vadd.f32 %v388, %v893
        %895 = vmatmul.bf16.gmra.mxu0 %v305
        %v896 = vpop.f32.mrf.mxu0
        %v897 = vadd.f32 %v388, %v896
        %v898 = vpop.f32.mrf.mxu0
        %v899 = vadd.f32 %v388, %v898
        %900 = vmatmul.bf16.gmra.mxu0 %v307
        %v901 = vpop.f32.mrf.mxu0
        %v902 = vadd.f32 %v388, %v901
        %v903 = vpop.f32.mrf.mxu0
        %904 = vdwg.mxu0
        %905 = vmatpush.bf16.msra.mxu0 %v644
        %906 = vmatpush.bf16.msra.mxu0 %v640
        %907 = vmatpush.bf16.msra.mxu0 %v636
        %908 = vmatpush.bf16.msra.mxu0 %v632
        %909 = vmatpush.bf16.msra.mxu0 %v628
        %910 = vmatpush.bf16.msra.mxu0 %v624
        %911 = vmatpush.bf16.msra.mxu0 %v620
        %912 = vmatpush.bf16.msra.mxu0 %v616
        %913 = vmatmul.bf16.gmra.mxu0 %v302
        %v914 = vpop.f32.mrf.mxu0
        %v915 = vadd.f32 %v887, %v914
        %v916 = vpop.f32.mrf.mxu0
        %v917 = vadd.f32 %v889, %v916
        %918 = vmatmul.bf16.gmra.mxu0 %v304
        %v919 = vpop.f32.mrf.mxu0
        %v920 = vadd.f32 %v892, %v919
        %v921 = vpop.f32.mrf.mxu0
        %v922 = vadd.f32 %v894, %v921
        %923 = vmatmul.bf16.gmra.mxu0 %v306
        %v924 = vpop.f32.mrf.mxu0
        %v925 = vadd.f32 %v897, %v924
        %v926 = vpop.f32.mrf.mxu0
        %v927 = vadd.f32 %v899, %v926
        %928 = vmatmul.bf16.gmra.mxu0 %v308
        %v929 = vpop.f32.mrf.mxu0
        %v930 = vadd.f32 %v902, %v929
        %v931 = vpop.f32.mrf.mxu0
        %932 = vdwg.mxu0
        %v933 = vadd.f32 %v747, %v803
        %v934 = vadd.f32 %v933, %v859
        %v935 = vadd.f32 %v934, %v915
        %936 = vadd.xlane.f32.xlu0 %v935
        %v937 = vpop.xlane.xlu0 %936
        %v938 = vadd.f32 %v749, %v805
        %v939 = vadd.f32 %v938, %v861
        %v940 = vadd.f32 %v939, %v917
        %941 = vadd.xlane.f32.xlu0 %v940
        %v942 = vpop.xlane.xlu0 %941
        %v943 = vadd.f32 %v752, %v808
        %v944 = vadd.f32 %v943, %v864
        %v945 = vadd.f32 %v944, %v920
        %946 = vadd.xlane.f32.xlu0 %v945
        %v947 = vpop.xlane.xlu0 %946
        %v948 = vadd.f32 %v754, %v810
        %v949 = vadd.f32 %v948, %v866
        %v950 = vadd.f32 %v949, %v922
        %951 = vadd.xlane.f32.xlu0 %v950
        %v952 = vpop.xlane.xlu0 %951
        %v953 = vadd.f32 %v757, %v813
        %v954 = vadd.f32 %v953, %v869
        %v955 = vadd.f32 %v954, %v925
        %956 = vadd.xlane.f32.xlu0 %v955
        %v957 = vpop.xlane.xlu0 %956
        %v958 = vadd.f32 %v759, %v815
        %v959 = vadd.f32 %v958, %v871
        %v960 = vadd.f32 %v959, %v927
        %961 = vadd.xlane.f32.xlu0 %v960
        %v962 = vpop.xlane.xlu0 %961
        %v963 = vadd.f32 %v762, %v818
        %v964 = vadd.f32 %v963, %v874
        %v965 = vadd.f32 %v964, %v930
        %966 = vadd.xlane.f32.xlu0 %v965
        %v967 = vpop.xlane.xlu0 %966
        %v968 = vmul.f32 %v937, 0.001953125
        %v969 = vmul.f32 %v942, 0.001953125
        %v970 = vmul.f32 %v947, 0.001953125
        %v971 = vmul.f32 %v952, 0.001953125
        %v972 = vmul.f32 %v957, 0.001953125
        %v973 = vmul.f32 %v962, 0.001953125
        %v974 = vmul.f32 %v967, 0.001953125
        %v975 = vmul.f32 %v747, %v747
        %v976 = vmul.f32 %v803, %v803
        %v977 = vmul.f32 %v859, %v859
        %v978 = vmul.f32 %v915, %v915
        %v979 = vmul.f32 %v749, %v749
        %v980 = vmul.f32 %v805, %v805
        %v981 = vmul.f32 %v861, %v861
        %v982 = vmul.f32 %v917, %v917
        %v983 = vmul.f32 %v752, %v752
        %v984 = vmul.f32 %v808, %v808
        %v985 = vmul.f32 %v864, %v864
        %v986 = vmul.f32 %v920, %v920
        %v987 = vmul.f32 %v754, %v754
        %v988 = vmul.f32 %v810, %v810
        %v989 = vmul.f32 %v866, %v866
        %v990 = vmul.f32 %v922, %v922
        %v991 = vmul.f32 %v757, %v757
        %v992 = vmul.f32 %v813, %v813
        %v993 = vmul.f32 %v869, %v869
        %v994 = vmul.f32 %v925, %v925
        %v995 = vmul.f32 %v759, %v759
        %v996 = vmul.f32 %v815, %v815
        %v997 = vmul.f32 %v871, %v871
        %v998 = vmul.f32 %v927, %v927
        %v999 = vmul.f32 %v762, %v762
        %v1000 = vmul.f32 %v818, %v818
        %v1001 = vmul.f32 %v874, %v874
        %v1002 = vmul.f32 %v930, %v930
        %v1003 = vadd.f32 %v975, %v976
        %v1004 = vadd.f32 %v1003, %v977
        %v1005 = vadd.f32 %v1004, %v978
        %1006 = vadd.xlane.f32.xlu0 %v1005
        %v1007 = vpop.xlane.xlu0 %1006
        %v1008 = vadd.f32 %v979, %v980
        %v1009 = vadd.f32 %v1008, %v981
        %v1010 = vadd.f32 %v1009, %v982
        %1011 = vadd.xlane.f32.xlu0 %v1010
        %v1012 = vpop.xlane.xlu0 %1011
        %v1013 = vadd.f32 %v983, %v984
        %v1014 = vadd.f32 %v1013, %v985
        %v1015 = vadd.f32 %v1014, %v986
        %1016 = vadd.xlane.f32.xlu0 %v1015
        %v1017 = vpop.xlane.xlu0 %1016
        %v1018 = vadd.f32 %v987, %v988
        %v1019 = vadd.f32 %v1018, %v989
        %v1020 = vadd.f32 %v1019, %v990
        %1021 = vadd.xlane.f32.xlu0 %v1020
        %v1022 = vpop.xlane.xlu0 %1021
        %v1023 = vadd.f32 %v991, %v992
        %v1024 = vadd.f32 %v1023, %v993
        %v1025 = vadd.f32 %v1024, %v994
        %1026 = vadd.xlane.f32.xlu0 %v1025
        %v1027 = vpop.xlane.xlu0 %1026
        %v1028 = vadd.f32 %v995, %v996
        %v1029 = vadd.f32 %v1028, %v997
        %v1030 = vadd.f32 %v1029, %v998
        %1031 = vadd.xlane.f32.xlu0 %v1030
        %v1032 = vpop.xlane.xlu0 %1031
        %v1033 = vadd.f32 %v999, %v1000
        %v1034 = vadd.f32 %v1033, %v1001
        %v1035 = vadd.f32 %v1034, %v1002
        %1036 = vadd.xlane.f32.xlu0 %v1035
        %v1037 = vpop.xlane.xlu0 %1036
        %v1038 = vmul.f32 %v1007, 0.001953125
        %v1039 = vmul.f32 %v1012, 0.001953125
        %v1040 = vmul.f32 %v1017, 0.001953125
        %v1041 = vmul.f32 %v1022, 0.001953125
        %v1042 = vmul.f32 %v1027, 0.001953125
        %v1043 = vmul.f32 %v1032, 0.001953125
        %v1044 = vmul.f32 %v1037, 0.001953125
        %v1045 = vmul.f32 %v968, %v968
        %v1046 = vmul.f32 %v969, %v969
        %v1047 = vmul.f32 %v970, %v970
        %v1048 = vmul.f32 %v971, %v971
        %v1049 = vmul.f32 %v972, %v972
        %v1050 = vmul.f32 %v973, %v973
        %v1051 = vmul.f32 %v974, %v974
        %v1052 = vsub.f32 %v1038, %v1045
        %v1053 = vsub.f32 %v1039, %v1046
        %v1054 = vsub.f32 %v1040, %v1047
        %v1055 = vsub.f32 %v1041, %v1048
        %v1056 = vsub.f32 %v1042, %v1049
        %v1057 = vsub.f32 %v1043, %v1050
        %v1058 = vsub.f32 %v1044, %v1051
        %v1059 = vadd.f32 %v1052, 1e-05
        %v1060 = vadd.f32 %v1053, 1e-05
        %v1061 = vadd.f32 %v1054, 1e-05
        %v1062 = vadd.f32 %v1055, 1e-05
        %v1063 = vadd.f32 %v1056, 1e-05
        %v1064 = vadd.f32 %v1057, 1e-05
        %v1065 = vadd.f32 %v1058, 1e-05
        %v1066 = vrsqrt.pop %v1059
        %v1067 = vmul.f32 %v1066, %v1059
        %v1068 = vmul.f32 %v1067, %v1066
        %v1069 = vmul.f32 0.5, %v1068
        %v1070 = vsub.f32 1.5, %v1069
        %v1071 = vmul.f32 %v1066, %v1070
        %vm1072 = vweird.f32 %v1059
        %vm1073 = vweird.f32 %v1066
        %vm1074 = vmor %vm1072, %vm1073
        %v1075 = vsel %vm1074, %v1066, %v1071
        %v1076 = vrsqrt.pop %v1060
        %v1077 = vmul.f32 %v1076, %v1060
        %v1078 = vmul.f32 %v1077, %v1076
        %v1079 = vmul.f32 0.5, %v1078
        %v1080 = vsub.f32 1.5, %v1079
        %v1081 = vmul.f32 %v1076, %v1080
        %vm1082 = vweird.f32 %v1060
        %vm1083 = vweird.f32 %v1076
        %vm1084 = vmor %vm1082, %vm1083
        %v1085 = vsel %vm1084, %v1076, %v1081
        %v1086 = vrsqrt.pop %v1061
        %v1087 = vmul.f32 %v1086, %v1061
        %v1088 = vmul.f32 %v1087, %v1086
        %v1089 = vmul.f32 0.5, %v1088
        %v1090 = vsub.f32 1.5, %v1089
        %v1091 = vmul.f32 %v1086, %v1090
        %vm1092 = vweird.f32 %v1061
        %vm1093 = vweird.f32 %v1086
        %vm1094 = vmor %vm1092, %vm1093
        %v1095 = vsel %vm1094, %v1086, %v1091
        %v1096 = vrsqrt.pop %v1062
        %v1097 = vmul.f32 %v1096, %v1062
        %v1098 = vmul.f32 %v1097, %v1096
        %v1099 = vmul.f32 0.5, %v1098
        %v1100 = vsub.f32 1.5, %v1099
        %v1101 = vmul.f32 %v1096, %v1100
        %vm1102 = vweird.f32 %v1062
        %vm1103 = vweird.f32 %v1096
        %vm1104 = vmor %vm1102, %vm1103
        %v1105 = vsel %vm1104, %v1096, %v1101
        %v1106 = vrsqrt.pop %v1063
        %v1107 = vmul.f32 %v1106, %v1063
        %v1108 = vmul.f32 %v1107, %v1106
        %v1109 = vmul.f32 0.5, %v1108
        %v1110 = vsub.f32 1.5, %v1109
        %v1111 = vmul.f32 %v1106, %v1110
        %vm1112 = vweird.f32 %v1063
        %vm1113 = vweird.f32 %v1106
        %vm1114 = vmor %vm1112, %vm1113
        %v1115 = vsel %vm1114, %v1106, %v1111
        %v1116 = vrsqrt.pop %v1064
        %v1117 = vmul.f32 %v1116, %v1064
        %v1118 = vmul.f32 %v1117, %v1116
        %v1119 = vmul.f32 0.5, %v1118
        %v1120 = vsub.f32 1.5, %v1119
        %v1121 = vmul.f32 %v1116, %v1120
        %vm1122 = vweird.f32 %v1064
        %vm1123 = vweird.f32 %v1116
        %vm1124 = vmor %vm1122, %vm1123
        %v1125 = vsel %vm1124, %v1116, %v1121
        %v1126 = vrsqrt.pop %v1065
        %v1127 = vmul.f32 %v1126, %v1065
        %v1128 = vmul.f32 %v1127, %v1126
        %v1129 = vmul.f32 0.5, %v1128
        %v1130 = vsub.f32 1.5, %v1129
        %v1131 = vmul.f32 %v1126, %v1130
        %vm1132 = vweird.f32 %v1065
        %vm1133 = vweird.f32 %v1126
        %vm1134 = vmor %vm1132, %vm1133
        %v1135 = vsel %vm1134, %v1126, %v1131
        %v1136 = vsub.f32 %v747, %v968
        %v1137 = vsub.f32 %v803, %v968
        %v1138 = vsub.f32 %v859, %v968
        %v1139 = vsub.f32 %v915, %v968
        %v1140 = vsub.f32 %v749, %v969
        %v1141 = vsub.f32 %v805, %v969
        %v1142 = vsub.f32 %v861, %v969
        %v1143 = vsub.f32 %v917, %v969
        %v1144 = vsub.f32 %v752, %v970
        %v1145 = vsub.f32 %v808, %v970
        %v1146 = vsub.f32 %v864, %v970
        %v1147 = vsub.f32 %v920, %v970
        %v1148 = vsub.f32 %v754, %v971
        %v1149 = vsub.f32 %v810, %v971
        %v1150 = vsub.f32 %v866, %v971
        %v1151 = vsub.f32 %v922, %v971
        %v1152 = vsub.f32 %v757, %v972
        %v1153 = vsub.f32 %v813, %v972
        %v1154 = vsub.f32 %v869, %v972
        %v1155 = vsub.f32 %v925, %v972
        %v1156 = vsub.f32 %v759, %v973
        %v1157 = vsub.f32 %v815, %v973
        %v1158 = vsub.f32 %v871, %v973
        %v1159 = vsub.f32 %v927, %v973
        %v1160 = vsub.f32 %v762, %v974
        %v1161 = vsub.f32 %v818, %v974
        %v1162 = vsub.f32 %v874, %v974
        %v1163 = vsub.f32 %v930, %v974
        %v1164 = vmul.f32 %v1136, %v1075
        %v1165 = vmul.f32 %v1137, %v1075
        %v1166 = vmul.f32 %v1138, %v1075
        %v1167 = vmul.f32 %v1139, %v1075
        %v1168 = vmul.f32 %v1140, %v1085
        %v1169 = vmul.f32 %v1141, %v1085
        %v1170 = vmul.f32 %v1142, %v1085
        %v1171 = vmul.f32 %v1143, %v1085
        %v1172 = vmul.f32 %v1144, %v1095
        %v1173 = vmul.f32 %v1145, %v1095
        %v1174 = vmul.f32 %v1146, %v1095
        %v1175 = vmul.f32 %v1147, %v1095
        %v1176 = vmul.f32 %v1148, %v1105
        %v1177 = vmul.f32 %v1149, %v1105
        %v1178 = vmul.f32 %v1150, %v1105
        %v1179 = vmul.f32 %v1151, %v1105
        %v1180 = vmul.f32 %v1152, %v1115
        %v1181 = vmul.f32 %v1153, %v1115
        %v1182 = vmul.f32 %v1154, %v1115
        %v1183 = vmul.f32 %v1155, %v1115
        %v1184 = vmul.f32 %v1156, %v1125
        %v1185 = vmul.f32 %v1157, %v1125
        %v1186 = vmul.f32 %v1158, %v1125
        %v1187 = vmul.f32 %v1159, %v1125
        %v1188 = vmul.f32 %v1160, %v1135
        %v1189 = vmul.f32 %v1161, %v1135
        %v1190 = vmul.f32 %v1162, %v1135
        %v1191 = vmul.f32 %v1163, %v1135
        %v1192 = vperm.slane %v309, 1
        %v1193 = vperm.slane %v309, 5
        %v1194 = vperm.slane %v310, 1
        %v1195 = vperm.slane %v310, 5
        %v1200 = vperm.slane %v1192, 1
        %v1201 = vperm.slane %v1193, 1
        %v1202 = vperm.slane %v1194, 1
        %v1203 = vperm.slane %v1195, 1
        %v1204 = vmul.f32 %v1164, %v1200
        %v1205 = vmul.f32 %v1165, %v1201
        %v1206 = vmul.f32 %v1166, %v1202
        %v1207 = vmul.f32 %v1167, %v1203
        %v1208 = vmul.f32 %v1168, %v1200
        %v1209 = vmul.f32 %v1169, %v1201
        %v1210 = vmul.f32 %v1170, %v1202
        %v1211 = vmul.f32 %v1171, %v1203
        %v1212 = vmul.f32 %v1172, %v1200
        %v1213 = vmul.f32 %v1173, %v1201
        %v1214 = vmul.f32 %v1174, %v1202
        %v1215 = vmul.f32 %v1175, %v1203
        %v1216 = vmul.f32 %v1176, %v1200
        %v1217 = vmul.f32 %v1177, %v1201
        %v1218 = vmul.f32 %v1178, %v1202
        %v1219 = vmul.f32 %v1179, %v1203
        %v1220 = vmul.f32 %v1180, %v1200
        %v1221 = vmul.f32 %v1181, %v1201
        %v1222 = vmul.f32 %v1182, %v1202
        %v1223 = vmul.f32 %v1183, %v1203
        %v1224 = vmul.f32 %v1184, %v1200
        %v1225 = vmul.f32 %v1185, %v1201
        %v1226 = vmul.f32 %v1186, %v1202
        %v1227 = vmul.f32 %v1187, %v1203
        %v1228 = vmul.f32 %v1188, %v1200
        %v1229 = vmul.f32 %v1189, %v1201
        %v1230 = vmul.f32 %v1190, %v1202
        %v1231 = vmul.f32 %v1191, %v1203
        %v1232 = vperm.slane %v309, 2
        %v1233 = vperm.slane %v309, 6
        %v1234 = vperm.slane %v310, 2
        %v1235 = vperm.slane %v310, 6
        %v1240 = vperm.slane %v1232, 2
        %v1241 = vperm.slane %v1233, 2
        %v1242 = vperm.slane %v1234, 2
        %v1243 = vperm.slane %v1235, 2
        %v1244 = vadd.f32 %v1204, %v1240
        %v1245 = vadd.f32 %v1205, %v1241
        %v1246 = vadd.f32 %v1206, %v1242
        %v1247 = vadd.f32 %v1207, %v1243
        %v1248 = vadd.f32 %v1208, %v1240
        %v1249 = vadd.f32 %v1209, %v1241
        %v1250 = vadd.f32 %v1210, %v1242
        %v1251 = vadd.f32 %v1211, %v1243
        %v1252 = vadd.f32 %v1212, %v1240
        %v1253 = vadd.f32 %v1213, %v1241
        %v1254 = vadd.f32 %v1214, %v1242
        %v1255 = vadd.f32 %v1215, %v1243
        %v1256 = vadd.f32 %v1216, %v1240
        %v1257 = vadd.f32 %v1217, %v1241
        %v1258 = vadd.f32 %v1218, %v1242
        %v1259 = vadd.f32 %v1219, %v1243
        %v1260 = vadd.f32 %v1220, %v1240
        %v1261 = vadd.f32 %v1221, %v1241
        %v1262 = vadd.f32 %v1222, %v1242
        %v1263 = vadd.f32 %v1223, %v1243
        %v1264 = vadd.f32 %v1224, %v1240
        %v1265 = vadd.f32 %v1225, %v1241
        %v1266 = vadd.f32 %v1226, %v1242
        %v1267 = vadd.f32 %v1227, %v1243
        %v1268 = vadd.f32 %v1228, %v1240
        %v1269 = vadd.f32 %v1229, %v1241
        %v1270 = vadd.f32 %v1230, %v1242
        %v1271 = vadd.f32 %v1231, %v1243
        %1272 = vst [vmem:[%s265] sm:$0xff] %v1244
        %1273 = vst [vmem:[%s265 + $0x8] sm:$0xff] %v1245
        %1274 = vst [vmem:[%s265 + $0x10] sm:$0xff] %v1246
        %1275 = vst [vmem:[%s265 + $0x18] sm:$0xff] %v1247
        %1276 = vst [vmem:[%s265 + $0x20] sm:$0xff] %v1248
        %1277 = vst [vmem:[%s265 + $0x28] sm:$0xff] %v1249
        %1278 = vst [vmem:[%s265 + $0x30] sm:$0xff] %v1250
        %1279 = vst [vmem:[%s265 + $0x38] sm:$0xff] %v1251
        %1280 = vst [vmem:[%s265 + $0x40] sm:$0xff] %v1252
        %1281 = vst [vmem:[%s265 + $0x48] sm:$0xff] %v1253
        %1282 = vst [vmem:[%s265 + $0x50] sm:$0xff] %v1254
        %1283 = vst [vmem:[%s265 + $0x58] sm:$0xff] %v1255
        %1284 = vst [vmem:[%s265 + $0x60] sm:$0xff] %v1256
        %1285 = vst [vmem:[%s265 + $0x68] sm:$0xff] %v1257
        %1286 = vst [vmem:[%s265 + $0x70] sm:$0xff] %v1258
        %1287 = vst [vmem:[%s265 + $0x78] sm:$0xff] %v1259
        %1288 = vst [vmem:[%s265 + $0x80] sm:$0xff] %v1260
        %1289 = vst [vmem:[%s265 + $0x88] sm:$0xff] %v1261
        %1290 = vst [vmem:[%s265 + $0x90] sm:$0xff] %v1262
        %1291 = vst [vmem:[%s265 + $0x98] sm:$0xff] %v1263
        %1292 = vst [vmem:[%s265 + $0xa0] sm:$0xff] %v1264
        %1293 = vst [vmem:[%s265 + $0xa8] sm:$0xff] %v1265
        %1294 = vst [vmem:[%s265 + $0xb0] sm:$0xff] %v1266
        %1295 = vst [vmem:[%s265 + $0xb8] sm:$0xff] %v1267
        %1296 = vst [vmem:[%s265 + $0xc0] sm:$0xff] %v1268
        %1297 = vst [vmem:[%s265 + $0xc8] sm:$0xff] %v1269
        %1298 = vst [vmem:[%s265 + $0xd0] sm:$0xff] %v1270
        %1299 = vst [vmem:[%s265 + $0xd8] sm:$0xff] %v1271
        %v1300 = vpack.c.bf16 %v1248, %v1244
        %v1301 = vpack.c.bf16 %v1249, %v1245
        %v1302 = vpack.c.bf16 %v1250, %v1246
        %v1303 = vpack.c.bf16 %v1251, %v1247
        %v1304 = vpack.c.bf16 %v1256, %v1252
        %v1305 = vpack.c.bf16 %v1257, %v1253
        %v1306 = vpack.c.bf16 %v1258, %v1254
        %v1307 = vpack.c.bf16 %v1259, %v1255
        %v1308 = vpack.c.bf16 %v1264, %v1260
        %v1309 = vpack.c.bf16 %v1265, %v1261
        %v1310 = vpack.c.bf16 %v1266, %v1262
        %v1311 = vpack.c.bf16 %v1267, %v1263
        %v1312 = vpack.c.bf16 %v1268, %v1268
        %v1313 = vpack.c.bf16 %v1269, %v1269
        %v1314 = vpack.c.bf16 %v1270, %v1270
        %v1315 = vpack.c.bf16 %v1271, %v1271
        %v1316 = vld [vmem:[%s3] sm:$0xf]
        %v1317 = vld [vmem:[%s3 + $0x4] sm:$0xf]
        %v1318 = vld [vmem:[%s3 + $0x8] sm:$0xf]
        %v1319 = vld [vmem:[%s3 + $0xc] sm:$0xf]
        %v1320 = vld [vmem:[%s3 + $0x10] sm:$0xf]
        %v1321 = vld [vmem:[%s3 + $0x14] sm:$0xf]
        %v1322 = vld [vmem:[%s3 + $0x18] sm:$0xf]
        %v1323 = vld [vmem:[%s3 + $0x1c] sm:$0xf]
        %v1324 = vld [vmem:[%s3 + $0x20] sm:$0xf]
        %v1325 = vld [vmem:[%s3 + $0x24] sm:$0xf]
        %v1326 = vld [vmem:[%s3 + $0x28] sm:$0xf]
        %v1327 = vld [vmem:[%s3 + $0x2c] sm:$0xf]
        %v1328 = vld [vmem:[%s3 + $0x30] sm:$0xf]
        %v1329 = vld [vmem:[%s3 + $0x34] sm:$0xf]
        %v1330 = vld [vmem:[%s3 + $0x38] sm:$0xf]
        %v1331 = vld [vmem:[%s3 + $0x3c] sm:$0xf]
        %v1332 = vld [vmem:[%s3 + $0x40] sm:$0xf]
        %v1333 = vld [vmem:[%s3 + $0x44] sm:$0xf]
        %v1334 = vld [vmem:[%s3 + $0x48] sm:$0xf]
        %v1335 = vld [vmem:[%s3 + $0x4c] sm:$0xf]
        %v1336 = vld [vmem:[%s3 + $0x50] sm:$0xf]
        %v1337 = vld [vmem:[%s3 + $0x54] sm:$0xf]
        %v1338 = vld [vmem:[%s3 + $0x58] sm:$0xf]
        %v1339 = vld [vmem:[%s3 + $0x5c] sm:$0xf]
        %v1340 = vld [vmem:[%s3 + $0x60] sm:$0xf]
        %v1341 = vld [vmem:[%s3 + $0x64] sm:$0xf]
        %v1342 = vld [vmem:[%s3 + $0x68] sm:$0xf]
        %v1343 = vld [vmem:[%s3 + $0x6c] sm:$0xf]
        %v1344 = vld [vmem:[%s3 + $0x70] sm:$0xf]
        %v1345 = vld [vmem:[%s3 + $0x74] sm:$0xf]
        %v1346 = vld [vmem:[%s3 + $0x78] sm:$0xf]
        %v1347 = vld [vmem:[%s3 + $0x7c] sm:$0xf]
        %v1348 = vld [vmem:[%s3 + $0x80] sm:$0xf]
        %v1349 = vld [vmem:[%s3 + $0x84] sm:$0xf]
        %v1350 = vld [vmem:[%s3 + $0x88] sm:$0xf]
        %v1351 = vld [vmem:[%s3 + $0x8c] sm:$0xf]
        %v1352 = vld [vmem:[%s3 + $0x90] sm:$0xf]
        %v1353 = vld [vmem:[%s3 + $0x94] sm:$0xf]
        %v1354 = vld [vmem:[%s3 + $0x98] sm:$0xf]
        %v1355 = vld [vmem:[%s3 + $0x9c] sm:$0xf]
        %v1356 = vld [vmem:[%s3 + $0xa0] sm:$0xf]
        %v1357 = vld [vmem:[%s3 + $0xa4] sm:$0xf]
        %v1358 = vld [vmem:[%s3 + $0xa8] sm:$0xf]
        %v1359 = vld [vmem:[%s3 + $0xac] sm:$0xf]
        %v1360 = vld [vmem:[%s3 + $0xb0] sm:$0xf]
        %v1361 = vld [vmem:[%s3 + $0xb4] sm:$0xf]
        %v1362 = vld [vmem:[%s3 + $0xb8] sm:$0xf]
        %v1363 = vld [vmem:[%s3 + $0xbc] sm:$0xf]
        %v1364 = vld [vmem:[%s3 + $0xc0] sm:$0xf]
        %v1365 = vld [vmem:[%s3 + $0xc4] sm:$0xf]
        %v1366 = vld [vmem:[%s3 + $0xc8] sm:$0xf]
        %v1367 = vld [vmem:[%s3 + $0xcc] sm:$0xf]
        %v1368 = vld [vmem:[%s3 + $0xd0] sm:$0xf]
        %v1369 = vld [vmem:[%s3 + $0xd4] sm:$0xf]
        %v1370 = vld [vmem:[%s3 + $0xd8] sm:$0xf]
        %v1371 = vld [vmem:[%s3 + $0xdc] sm:$0xf]
        %v1372 = vld [vmem:[%s3 + $0xe0] sm:$0xf]
        %v1373 = vld [vmem:[%s3 + $0xe4] sm:$0xf]
        %v1374 = vld [vmem:[%s3 + $0xe8] sm:$0xf]
        %v1375 = vld [vmem:[%s3 + $0xec] sm:$0xf]
        %v1376 = vld [vmem:[%s3 + $0xf0] sm:$0xf]
        %v1377 = vld [vmem:[%s3 + $0xf4] sm:$0xf]
        %v1378 = vld [vmem:[%s3 + $0xf8] sm:$0xf]
        %v1379 = vld [vmem:[%s3 + $0xfc] sm:$0xf]
        %v1380 = vld [vmem:[%s4] sm:$0x1]
        %v1382 = vperm.slane %v1380, 0
        %v1448 = vunpack.c.l.b16 %v1316
        %v1449 = vunpack.c.l.b16 %v1317
        %v1450 = vunpack.c.l.b16 %v1318
        %v1451 = vunpack.c.l.b16 %v1319
        %v1452 = vunpack.c.l.b16 %v1320
        %v1453 = vunpack.c.l.b16 %v1321
        %v1454 = vunpack.c.l.b16 %v1322
        %v1455 = vunpack.c.l.b16 %v1323
        %v1456 = vunpack.c.l.b16 %v1324
        %v1457 = vunpack.c.l.b16 %v1325
        %v1458 = vunpack.c.l.b16 %v1326
        %v1459 = vunpack.c.l.b16 %v1327
        %v1460 = vunpack.c.l.b16 %v1328
        %v1461 = vunpack.c.l.b16 %v1329
        %v1462 = vunpack.c.l.b16 %v1330
        %v1463 = vunpack.c.l.b16 %v1331
        %v1464 = vunpack.c.l.b16 %v1332
        %v1465 = vunpack.c.l.b16 %v1333
        %v1466 = vunpack.c.l.b16 %v1334
        %v1467 = vunpack.c.l.b16 %v1335
        %v1468 = vunpack.c.l.b16 %v1336
        %v1469 = vunpack.c.l.b16 %v1337
        %v1470 = vunpack.c.l.b16 %v1338
        %v1471 = vunpack.c.l.b16 %v1339
        %v1472 = vunpack.c.l.b16 %v1340
        %v1473 = vunpack.c.l.b16 %v1341
        %v1474 = vunpack.c.l.b16 %v1342
        %v1475 = vunpack.c.l.b16 %v1343
        %v1476 = vunpack.c.l.b16 %v1344
        %v1477 = vunpack.c.l.b16 %v1345
        %v1478 = vunpack.c.l.b16 %v1346
        %v1479 = vunpack.c.l.b16 %v1347
        %v1480 = vunpack.c.l.b16 %v1348
        %v1481 = vunpack.c.l.b16 %v1349
        %v1482 = vunpack.c.l.b16 %v1350
        %v1483 = vunpack.c.l.b16 %v1351
        %v1484 = vunpack.c.l.b16 %v1352
        %v1485 = vunpack.c.l.b16 %v1353
        %v1486 = vunpack.c.l.b16 %v1354
        %v1487 = vunpack.c.l.b16 %v1355
        %v1488 = vunpack.c.l.b16 %v1356
        %v1489 = vunpack.c.l.b16 %v1357
        %v1490 = vunpack.c.l.b16 %v1358
        %v1491 = vunpack.c.l.b16 %v1359
        %v1492 = vunpack.c.l.b16 %v1360
        %v1493 = vunpack.c.l.b16 %v1361
        %v1494 = vunpack.c.l.b16 %v1362
        %v1495 = vunpack.c.l.b16 %v1363
        %v1496 = vunpack.c.l.b16 %v1364
        %v1497 = vunpack.c.l.b16 %v1365
        %v1498 = vunpack.c.l.b16 %v1366
        %v1499 = vunpack.c.l.b16 %v1367
        %v1500 = vunpack.c.l.b16 %v1368
        %v1501 = vunpack.c.l.b16 %v1369
        %v1502 = vunpack.c.l.b16 %v1370
        %v1503 = vunpack.c.l.b16 %v1371
        %v1504 = vunpack.c.l.b16 %v1372
        %v1505 = vunpack.c.l.b16 %v1373
        %v1506 = vunpack.c.l.b16 %v1374
        %v1507 = vunpack.c.l.b16 %v1375
        %v1508 = vunpack.c.l.b16 %v1376
        %v1509 = vunpack.c.l.b16 %v1377
        %v1510 = vunpack.c.l.b16 %v1378
        %v1511 = vunpack.c.l.b16 %v1379
        %v1512 = vpack.c.b16 %v1449, %v1448
        %v1513 = vpack.c.b16 %v1451, %v1450
        %v1514 = vpack.c.b16 %v1453, %v1452
        %v1515 = vpack.c.b16 %v1455, %v1454
        %v1516 = vpack.c.b16 %v1457, %v1456
        %v1517 = vpack.c.b16 %v1459, %v1458
        %v1518 = vpack.c.b16 %v1461, %v1460
        %v1519 = vpack.c.b16 %v1463, %v1462
        %v1520 = vpack.c.b16 %v1465, %v1464
        %v1521 = vpack.c.b16 %v1467, %v1466
        %v1522 = vpack.c.b16 %v1469, %v1468
        %v1523 = vpack.c.b16 %v1471, %v1470
        %v1524 = vpack.c.b16 %v1473, %v1472
        %v1525 = vpack.c.b16 %v1475, %v1474
        %v1526 = vpack.c.b16 %v1477, %v1476
        %v1527 = vpack.c.b16 %v1479, %v1478
        %v1528 = vpack.c.b16 %v1481, %v1480
        %v1529 = vpack.c.b16 %v1483, %v1482
        %v1530 = vpack.c.b16 %v1485, %v1484
        %v1531 = vpack.c.b16 %v1487, %v1486
        %v1532 = vpack.c.b16 %v1489, %v1488
        %v1533 = vpack.c.b16 %v1491, %v1490
        %v1534 = vpack.c.b16 %v1493, %v1492
        %v1535 = vpack.c.b16 %v1495, %v1494
        %v1536 = vpack.c.b16 %v1497, %v1496
        %v1537 = vpack.c.b16 %v1499, %v1498
        %v1538 = vpack.c.b16 %v1501, %v1500
        %v1539 = vpack.c.b16 %v1503, %v1502
        %v1540 = vpack.c.b16 %v1505, %v1504
        %v1541 = vpack.c.b16 %v1507, %v1506
        %v1542 = vpack.c.b16 %v1509, %v1508
        %v1543 = vpack.c.b16 %v1511, %v1510
        %1576 = vmatpush.bf16.msra.mxu0 %v1519
        %1577 = vmatpush.bf16.msra.mxu0 %v1518
        %1578 = vmatpush.bf16.msra.mxu0 %v1517
        %1579 = vmatpush.bf16.msra.mxu0 %v1516
        %1580 = vmatpush.bf16.msra.mxu0 %v1515
        %1581 = vmatpush.bf16.msra.mxu0 %v1514
        %1582 = vmatpush.bf16.msra.mxu0 %v1513
        %1583 = vmatpush.bf16.msra.mxu0 %v1512
        %1584 = vmatmul.bf16.gmra.mxu0 %v1300
        %v1585 = vpop.f32.mrf.mxu0
        %v1586 = vadd.f32 %v1382, %v1585
        %v1587 = vpop.f32.mrf.mxu0
        %v1588 = vadd.f32 %v1382, %v1587
        %1589 = vmatmul.bf16.gmra.mxu0 %v1304
        %v1590 = vpop.f32.mrf.mxu0
        %v1591 = vadd.f32 %v1382, %v1590
        %v1592 = vpop.f32.mrf.mxu0
        %v1593 = vadd.f32 %v1382, %v1592
        %1594 = vmatmul.bf16.gmra.mxu0 %v1308
        %v1595 = vpop.f32.mrf.mxu0
        %v1596 = vadd.f32 %v1382, %v1595
        %v1597 = vpop.f32.mrf.mxu0
        %v1598 = vadd.f32 %v1382, %v1597
        %1599 = vmatmul.bf16.gmra.mxu0 %v1312
        %v1600 = vpop.f32.mrf.mxu0
        %v1601 = vadd.f32 %v1382, %v1600
        %v1602 = vpop.f32.mrf.mxu0
        %1603 = vdwg.mxu0
        %1604 = vmatpush.bf16.msra.mxu0 %v1527
        %1605 = vmatpush.bf16.msra.mxu0 %v1526
        %1606 = vmatpush.bf16.msra.mxu0 %v1525
        %1607 = vmatpush.bf16.msra.mxu0 %v1524
        %1608 = vmatpush.bf16.msra.mxu0 %v1523
        %1609 = vmatpush.bf16.msra.mxu0 %v1522
        %1610 = vmatpush.bf16.msra.mxu0 %v1521
        %1611 = vmatpush.bf16.msra.mxu0 %v1520
        %1612 = vmatmul.bf16.gmra.mxu0 %v1301
        %v1613 = vpop.f32.mrf.mxu0
        %v1614 = vadd.f32 %v1586, %v1613
        %v1615 = vpop.f32.mrf.mxu0
        %v1616 = vadd.f32 %v1588, %v1615
        %1617 = vmatmul.bf16.gmra.mxu0 %v1305
        %v1618 = vpop.f32.mrf.mxu0
        %v1619 = vadd.f32 %v1591, %v1618
        %v1620 = vpop.f32.mrf.mxu0
        %v1621 = vadd.f32 %v1593, %v1620
        %1622 = vmatmul.bf16.gmra.mxu0 %v1309
        %v1623 = vpop.f32.mrf.mxu0
        %v1624 = vadd.f32 %v1596, %v1623
        %v1625 = vpop.f32.mrf.mxu0
        %v1626 = vadd.f32 %v1598, %v1625
        %1627 = vmatmul.bf16.gmra.mxu0 %v1313
        %v1628 = vpop.f32.mrf.mxu0
        %v1629 = vadd.f32 %v1601, %v1628
        %v1630 = vpop.f32.mrf.mxu0
        %1631 = vdwg.mxu0
        %1632 = vmatpush.bf16.msra.mxu0 %v1535
        %1633 = vmatpush.bf16.msra.mxu0 %v1534
        %1634 = vmatpush.bf16.msra.mxu0 %v1533
        %1635 = vmatpush.bf16.msra.mxu0 %v1532
        %1636 = vmatpush.bf16.msra.mxu0 %v1531
        %1637 = vmatpush.bf16.msra.mxu0 %v1530
        %1638 = vmatpush.bf16.msra.mxu0 %v1529
        %1639 = vmatpush.bf16.msra.mxu0 %v1528
        %1640 = vmatmul.bf16.gmra.mxu0 %v1302
        %v1641 = vpop.f32.mrf.mxu0
        %v1642 = vadd.f32 %v1614, %v1641
        %v1643 = vpop.f32.mrf.mxu0
        %v1644 = vadd.f32 %v1616, %v1643
        %1645 = vmatmul.bf16.gmra.mxu0 %v1306
        %v1646 = vpop.f32.mrf.mxu0
        %v1647 = vadd.f32 %v1619, %v1646
        %v1648 = vpop.f32.mrf.mxu0
        %v1649 = vadd.f32 %v1621, %v1648
        %1650 = vmatmul.bf16.gmra.mxu0 %v1310
        %v1651 = vpop.f32.mrf.mxu0
        %v1652 = vadd.f32 %v1624, %v1651
        %v1653 = vpop.f32.mrf.mxu0
        %v1654 = vadd.f32 %v1626, %v1653
        %1655 = vmatmul.bf16.gmra.mxu0 %v1314
        %v1656 = vpop.f32.mrf.mxu0
        %v1657 = vadd.f32 %v1629, %v1656
        %v1658 = vpop.f32.mrf.mxu0
        %1659 = vdwg.mxu0
        %1660 = vmatpush.bf16.msra.mxu0 %v1543
        %1661 = vmatpush.bf16.msra.mxu0 %v1542
        %1662 = vmatpush.bf16.msra.mxu0 %v1541
        %1663 = vmatpush.bf16.msra.mxu0 %v1540
        %1664 = vmatpush.bf16.msra.mxu0 %v1539
        %1665 = vmatpush.bf16.msra.mxu0 %v1538
        %1666 = vmatpush.bf16.msra.mxu0 %v1537
        %1667 = vmatpush.bf16.msra.mxu0 %v1536
        %1668 = vmatmul.bf16.gmra.mxu0 %v1303
        %v1669 = vpop.f32.mrf.mxu0
        %v1670 = vadd.f32 %v1642, %v1669
        %v1671 = vpop.f32.mrf.mxu0
        %v1672 = vadd.f32 %v1644, %v1671
        %1673 = vmatmul.bf16.gmra.mxu0 %v1307
        %v1674 = vpop.f32.mrf.mxu0
        %v1675 = vadd.f32 %v1647, %v1674
        %v1676 = vpop.f32.mrf.mxu0
        %v1677 = vadd.f32 %v1649, %v1676
        %1678 = vmatmul.bf16.gmra.mxu0 %v1311
        %v1679 = vpop.f32.mrf.mxu0
        %v1680 = vadd.f32 %v1652, %v1679
        %v1681 = vpop.f32.mrf.mxu0
        %v1682 = vadd.f32 %v1654, %v1681
        %1683 = vmatmul.bf16.gmra.mxu0 %v1315
        %v1684 = vpop.f32.mrf.mxu0
        %v1685 = vadd.f32 %v1657, %v1684
        %v1686 = vpop.f32.mrf.mxu0
        %1687 = vdwg.mxu0
        %vm1688 = vcmask 15360
        %1689 = vst.msk [vmem:[%s285] sm:$0xff] %vm1688, %v1670
        %1690 = vst.msk [vmem:[%s285 + $0x8] sm:$0xff] %vm1688, %v1672
        %1691 = vst.msk [vmem:[%s285 + $0x10] sm:$0xff] %vm1688, %v1675
        %1692 = vst.msk [vmem:[%s285 + $0x18] sm:$0xff] %vm1688, %v1677
        %1693 = vst.msk [vmem:[%s285 + $0x20] sm:$0xff] %vm1688, %v1680
        %1694 = vst.msk [vmem:[%s285 + $0x28] sm:$0xff] %vm1688, %v1682
        %1695 = vst.msk [vmem:[%s285 + $0x30] sm:$0xff] %vm1688, %v1685
        %s1696 = sand.u32 %s140, 1
        %s1697 = scalar_lea.sflag [#allocation4], %s1696
        %s1698 = sand.u32 %s140, 1
        %s1699 = smul.addr %s1698, 224
        %s1700 = scalar_lea.vmem [#allocation5], %s1699
        %s1701 = smul.u32 7, %s22
        %p1702 = scmp.lt.s32.totalorder %s1701, 13
        %s1703 = scalar_select %p1702, %s1701, 13
        %s1704 = smul.addr %s1703, 8
        %s1705 = scalar_lea.vmem %s6, %s1704
        // Predicated region
        $region45: #{tpu_custom_call.1} parent=39 // pred_check
          %p1706 = pneg %p150
        $region46: #{tpu_custom_call.1} parent=39 // pred_check_branch
          %1708 = sbr.rel (%p1706) target = $region48
        $region47: #{tpu_custom_call.1} parent=39 // pred_region
          %s1709 = smul.u32 7, %s22
          %1711 = vsyncadd %s1697, 0
          %s1712 = smul.addr %s1709, 4
          %s1713 = smul.addr %s1712, 8
          %s1714 = scalar_lea.hbm %s5, %s1713
          %s1715 = sshll.u32 %s1700, 4
          %s1716 = int_to_ptr.vmem [resolvable:$true] %s1715
          %s1717 = sshll.u32 %s1714, 4
          %s1718 = int_to_ptr.hbm [resolvable:$true] %s1717
          %1723 = dma.vmem_to_hbm [thread:$0]  %s1716, 3584, %s1718, %s1697, 512, 512, 32
        $region48: #{tpu_custom_call.1} parent=39 // pred_fallthru
          _
        // Predicated region
        $region49: #{tpu_custom_call.1} parent=39 // pred_check
          %p1724 = pneg %p176
        $region50: #{tpu_custom_call.1} parent=39 // pred_check_branch
          %1726 = sbr.rel (%p1724) target = $region52
        $region51: #{tpu_custom_call.1} parent=39 // pred_region
          %s1727 = smul.u32 7, %s22
        $region52: #{tpu_custom_call.1} parent=39 // pred_fallthru
          _
      $region40: #{tpu_custom_call.1} parent=5 // pred_fallthru
        _
      %p1728 = scmp.le.s32.totalorder 2, %s17
      // Predicated region
      $region53: #{tpu_custom_call.1} parent=5 // pred_check
        %p1729 = pneg %p1728
      $region54: #{tpu_custom_call.1} parent=5 // pred_check_branch
        %1731 = sbr.rel (%p1729) target = $region56
      $region55: #{tpu_custom_call.1} parent=5 // pred_region
        %s1732 = ssub.s32 %s17, 2
        // Predicated region
        $region57: #{tpu_custom_call.1} parent=55 // pred_check
          %p1733 = pneg %p156
        $region58: #{tpu_custom_call.1} parent=55 // pred_check_branch
          %1735 = sbr.rel (%p1733) target = $region60
        $region59: #{tpu_custom_call.1} parent=55 // pred_region
          %s1736 = sand.u32 %s141, 1
          %s1737 = scalar_lea.sflag [#allocation4], %s1736
          %s1738 = sand.u32 %s141, 1
          %s1739 = smul.addr %s1738, 224
          %s1740 = scalar_lea.vmem [#allocation5], %s1739
          %1742 = dma.done %s1737, 3584
        $region60: #{tpu_custom_call.1} parent=55 // pred_fallthru
          _
        // Predicated region
        $region61: #{tpu_custom_call.1} parent=55 // pred_check
          %p1743 = pneg %p182
        $region62: #{tpu_custom_call.1} parent=55 // pred_check_branch
          %1745 = sbr.rel (%p1743) target = $region64
        $region63: #{tpu_custom_call.1} parent=55 // pred_region
          %s1746 = smul.u32 7, %s23
          %p1747 = scmp.lt.s32.totalorder %s1746, 13
          %s1748 = scalar_select %p1747, %s1746, 13
          %s1749 = smul.addr %s1748, 8
          %s1750 = scalar_lea.vmem %s6, %s1749
        $region64: #{tpu_custom_call.1} parent=55 // pred_fallthru
          _
      $region56: #{tpu_custom_call.1} parent=5 // pred_fallthru
        _
    $region6: #{tpu_custom_call.1} parent=1 // loop_footer
      %s21 = sadd.s32 1, %s17
    $region7: #{tpu_custom_call.1} parent=1 // loop_footer_branch
      %16 = sbr.rel target = $region3
    $region8: #{tpu_custom_call.1} parent=1 // loop_exit
      _
    %1751 = vsyncpa [#allocation3], 1
    %s1752 = scalar_lea.sflag [#allocation3], 1
    %1753 = vsyncpa %s1752, 1
    %1754 = vsyncpa [#allocation4], 1
    %s1755 = scalar_lea.sflag [#allocation4], 1
    %1756 = vsyncpa %s1755, 1

</llo_original>
